<compile_context>
chip_gen: v5e
topology: v5e:2x2
jax: 0.10.0
libtpu: 0.0.40
codegen_flags: <defaults>
</compile_context>

<pallas_src>
import functools

import jax
import jax.numpy as jnp
from jax.experimental import pallas as pl
from jax.experimental.pallas import tpu as pltpu


# ----------------------------------------------------------------------------
# Small helpers
# ----------------------------------------------------------------------------
def _round_up(n, m):
    return ((n + m - 1) // m) * m


def _pad2d(x, rows, cols):
    """Zero-pad a 2D array to (rows, cols)."""
    return jnp.zeros((rows, cols), x.dtype).at[: x.shape[0], : x.shape[1]].set(x)


def gcn_norm_dense(edge_index, num_nodes):
    """Dense A_hat = D^-1/2 (A + I) D^-1/2 (GCNConv default normalization).

    Note: duplicate edges in edge_index are de-duplicated (binary adjacency);
    PyG's GCNConv would sum duplicates. Matches the usual GCN assumption.
    """
    src, dst = edge_index
    adj = jnp.zeros((num_nodes, num_nodes), jnp.float32)
    adj = adj.at[src, dst].set(1.0)
    adj = adj + jnp.eye(num_nodes, dtype=jnp.float32)  # add self-loops
    deg = jnp.sum(adj, axis=1)
    d_inv_sqrt = jnp.where(deg > 0, jax.lax.rsqrt(deg), 0.0)
    return adj * d_inv_sqrt[:, None] * d_inv_sqrt[None, :]


def make_params(key, in_channels, out_channels):
    """Deterministic glorot-ish weights + small biases for the 7 GCNConv layers."""
    dims = [
        (in_channels, 4 * out_channels),          # conv1
        (4 * out_channels, 16 * out_channels),    # conv1b
        (16 * out_channels, 32 * out_channels),   # conv1c
        (32 * out_channels, 16 * out_channels),   # conv1d
        (16 * out_channels, 4 * out_channels),    # conv1e
        (4 * out_channels, out_channels),         # conv_mu
        (4 * out_channels, out_channels),         # conv_logstd
    ]
    params = []
    for i, (fi, fo) in enumerate(dims):
        k = jax.random.fold_in(key, i)
        scale = (6.0 / (fi + fo)) ** 0.5
        w = jax.random.uniform(k, (fi, fo), jnp.float32, -scale, scale)
        b = jax.random.uniform(jax.random.fold_in(key, 1000 + i), (fo,),
                               jnp.float32, -0.1, 0.1)
        params.append((w, b))
    return params


# ----------------------------------------------------------------------------
# One-time parameter preparation (hoisted out of the forward hot path)
# ----------------------------------------------------------------------------
def prepare_params(params, in_channels, compute_dtype=jnp.bfloat16):
    """Fuse the mu/logstd head, zero-pad every weight/bias to 128-lane
    multiples, pack all 128-lane-wide weights into one tall buffer and all
    biases into one [8, 512] f32 buffer (fewer, fatter DMAs)."""
    w_mu, b_mu = params[5]
    w_ls, b_ls = params[6]
    w_head = jnp.concatenate([w_mu, w_ls], axis=1)           # [F_in, 2*C]
    b_head = jnp.concatenate([b_mu, b_ls])                   # [2*C]
    layers = list(params[:5]) + [(w_head, b_head)]

    prev_pad = _round_up(in_channels, 128)
    padded = []
    for w, b in layers:
        fi_true, fo_true = w.shape
        fi_pad, fo_pad = prev_pad, _round_up(fo_true, 128)
        padded.append((_pad2d(w, fi_pad, fo_pad), b, fi_true, fo_true, fi_pad, fo_pad))
        prev_pad = fo_pad

    # Pack biases: row l holds layer l's bias (kept f32 -> exact bias add).
    b_cols = max(p[5] for p in padded)
    b_rows = _round_up(len(padded), 8)
    bias_pack = jnp.zeros((b_rows, b_cols), jnp.float32)
    for l, (_wp, b, *_rest) in enumerate(padded):
        bias_pack = bias_pack.at[l, : b.shape[0]].set(b.astype(jnp.float32))

    # Pack every 128-lane-wide weight vertically into one buffer.
    meta, small_blocks, big = [], [], []
    row = 0
    for w_p, _b, fi_t, fo_t, fi_p, fo_p in padded:
        if fo_p == 128:
            meta.append(dict(src="small", r0=row, fi_true=fi_t, fo_true=fo_t,
                             fi_pad=fi_p, fo_pad=fo_p))
            small_blocks.append(w_p)
            row += fi_p
        else:
            meta.append(dict(src="big", idx=len(big), fi_true=fi_t, fo_true=fo_t,
                             fi_pad=fi_p, fo_pad=fo_p))
            big.append(w_p.astype(compute_dtype))
    w_small = jnp.concatenate(small_blocks, axis=0).astype(compute_dtype)

    prepped = dict(w_small=w_small, w_big=tuple(big), bias=bias_pack)
    return prepped, tuple(meta)


# ----------------------------------------------------------------------------
# Fused Pallas kernel: 5 x (GCNConv + ReLU) followed by the fused mu/logstd head
# ----------------------------------------------------------------------------
def _make_fused_kernel(meta, n_big, compute_dtype):
    num_layers = len(meta)

    def kernel(*refs):
        a_ref, x_ref, wsmall_ref = refs[:3]
        big_refs = refs[3:3 + n_big]
        b_ref = refs[3 + n_big]
        out_ref = refs[4 + n_big]

        a = a_ref[...]                        # [n_pad, n_pad]  (compute_dtype)
        h = x_ref[...].astype(jnp.float32)    # activations stay f32 (bias+ReLU)

        for l, m in enumerate(meta):
            if m["src"] == "small":
                w = wsmall_ref[m["r0"]:m["r0"] + m["fi_pad"], :]   # static slice
            else:
                w = big_refs[m["idx"]][...]
            b = b_ref[l:l + 1, 0:m["fo_pad"]]                      # [1, fo_pad] f32
            hb = h.astype(compute_dtype)

            # Association chosen from TRUE (unpadded) dims: the N x N aggregation
            # always contracts against min(F_in, F_out).
            if m["fo_true"] > m["fi_true"]:
                t = jnp.dot(a, hb, preferred_element_type=jnp.float32)
                z = jnp.dot(t.astype(compute_dtype), w,
                            preferred_element_type=jnp.float32)
            else:
                t = jnp.dot(hb, w, preferred_element_type=jnp.float32)
                z = jnp.dot(a, t.astype(compute_dtype),
                            preferred_element_type=jnp.float32)

            if l + 1 < num_layers:
                h = jnp.maximum(z + b, 0.0)          # bias + ReLU on the VPU (f32)
            else:
                out_ref[...] = (z + b).astype(out_ref.dtype)

    return kernel


# ----------------------------------------------------------------------------
# Forward-pass builder (everything under one jit; single pallas_call)
# ----------------------------------------------------------------------------
def make_variational_gcn_encoder(params, num_nodes, in_channels,
                                 compute_dtype=jnp.bfloat16):
    out_channels = params[-1][0].shape[1]
    prepped, meta = prepare_params(params, in_channels, compute_dtype)
    n_big = len(prepped["w_big"])

    sublane = 16 if jnp.dtype(compute_dtype).itemsize == 2 else 8
    n_pad = _round_up(num_nodes, sublane)
    f_in_pad = _round_up(in_channels, 128)
    head_pad = meta[-1]["fo_pad"]

    kernel = _make_fused_kernel(meta, n_big, compute_dtype)

    # Advisory cost estimate so XLA can schedule the kernel against the
    # surrounding (fused) ops.
    flops = 0
    for m in meta:
        agg_w = m["fi_pad"] if m["fo_true"] > m["fi_true"] else m["fo_pad"]
        flops += 2 * n_pad * n_pad * agg_w + 2 * n_pad * m["fi_pad"] * m["fo_pad"]
    param_bytes = sum(int(a.size) * a.dtype.itemsize
                      for a in (prepped["w_small"], *prepped["w_big"], prepped["bias"]))
    io_bytes = ((n_pad * n_pad + n_pad * f_in_pad) * jnp.dtype(compute_dtype).itemsize
                + n_pad * head_pad * 4)
    cost = pl.CostEstimate(flops=flops, transcendentals=0,
                           bytes_accessed=param_bytes + io_bytes)

    n_inputs = 3 + n_big + 1
    call = pl.pallas_call(
        kernel,
        out_shape=jax.ShapeDtypeStruct((n_pad, head_pad), jnp.float32),
        in_specs=[pl.BlockSpec(memory_space=pltpu.MemorySpace.VMEM)] * n_inputs,
        out_specs=pl.BlockSpec(memory_space=pltpu.MemorySpace.VMEM),
        cost_estimate=cost,
        compiler_params=pltpu.CompilerParams(vmem_limit_bytes=32 * 1024 * 1024),
    )

    def _forward(x, edge_index, p):
        a_hat = gcn_norm_dense(edge_index, num_nodes)
        a_pad = _pad2d(a_hat, n_pad, n_pad).astype(compute_dtype)
        x_pad = _pad2d(x, n_pad, f_in_pad).astype(compute_dtype)
        out = call(a_pad, x_pad, p["w_small"], *p["w_big"], p["bias"])
        mu = out[:num_nodes, :out_channels]
        logstd = out[:num_nodes, out_channels:2 * out_channels]
        return mu, logstd

    fwd = jax.jit(_forward)
    return functools.partial(lambda f, p, x, ei: f(x, ei, p), fwd, prepped)


# ----------------------------------------------------------------------------
# Pure-JAX reference (for correctness check)
# ----------------------------------------------------------------------------
def _reference(x, edge_index, params):
    a_hat = gcn_norm_dense(edge_index, x.shape[0])
    hi = jax.lax.Precision.HIGHEST
    h = x
    for w, b in params[:5]:
        h = jnp.maximum(jnp.matmul(a_hat, jnp.matmul(h, w, precision=hi),
                                   precision=hi) + b, 0.0)
    w_mu, b_mu = params[5]
    w_ls, b_ls = params[6]
    mu = jnp.matmul(a_hat, jnp.matmul(h, w_mu, precision=hi), precision=hi) + b_mu
    ls = jnp.matmul(a_hat, jnp.matmul(h, w_ls, precision=hi), precision=hi) + b_ls
    return mu, ls


# ----------------------------------------------------------------------------
# main
# ----------------------------------------------------------------------------
if __name__ == "__main__":
    key = jax.random.PRNGKey(0)

    num_nodes = 8          # small path graph
    in_channels = 35       # GridDataset sets num_features = 35
    out_channels = 16      # as in the reference script

    kx, kp = jax.random.split(key)
    x = jax.random.normal(kx, (num_nodes, in_channels), jnp.float32)

    # undirected path graph 0-1-2-...-7 (both directions), shape [2, E]
    src = jnp.arange(num_nodes - 1, dtype=jnp.int32)
    dst = src + 1
    edge_index = jnp.stack(
        [jnp.concatenate([src, dst]), jnp.concatenate([dst, src])], axis=0
    )

    params = make_params(kp, in_channels, out_channels)

    forward = make_variational_gcn_encoder(params, num_nodes, in_channels)
    mu, logstd = forward(x, edge_index)
    jax.block_until_ready((mu, logstd))

    assert mu.shape == (num_nodes, out_channels)
    assert logstd.shape == (num_nodes, out_channels)

    # Correctness check against a pure-JAX f32 HIGHEST-precision reference.
    # Tolerance covers bf16 MXU-operand quantization (observed abs error ~1e-3
    # at these magnitudes).
    mu_ref, logstd_ref = _reference(x, edge_index, params)
    err = float(jnp.max(jnp.abs(mu - mu_ref)) + jnp.max(jnp.abs(logstd - logstd_ref)))
    assert err < 2e-2, f"mismatch vs reference: {err}"

    print("KERNEL_OK")
</pallas_src>

<mosaic_0001>
module attributes {stable_mosaic.version = 11 : i64} {
  func.func @kernel(%arg0: memref<16x16xbf16, #tpu.memory_space<vmem>>, %arg1: memref<16x128xbf16, #tpu.memory_space<vmem>>, %arg2: memref<512x128xbf16, #tpu.memory_space<vmem>>, %arg3: memref<128x256xbf16, #tpu.memory_space<vmem>>, %arg4: memref<256x512xbf16, #tpu.memory_space<vmem>>, %arg5: memref<512x256xbf16, #tpu.memory_space<vmem>>, %arg6: memref<8x512xf32, #tpu.memory_space<vmem>>, %arg7: memref<16x128xf32, #tpu.memory_space<vmem>>) attributes {dimension_semantics = [], scalar_prefetch = 0 : i64, scratch_operands = 0 : i64, tpu.core_type = #tpu.core_type<tc>} {
    %c0 = arith.constant 0 : index
    %c0_0 = arith.constant 0 : index
    %0 = vector.load %arg0[%c0, %c0_0] : memref<16x16xbf16, #tpu.memory_space<vmem>>, vector<16x16xbf16>
    %c0_1 = arith.constant 0 : index
    %c0_2 = arith.constant 0 : index
    %1 = vector.load %arg1[%c0_1, %c0_2] : memref<16x128xbf16, #tpu.memory_space<vmem>>, vector<16x128xbf16>
    %2 = arith.extf %1 : vector<16x128xbf16> to vector<16x128xf32>
    %c0_3 = arith.constant 0 : index
    %c0_4 = arith.constant 0 : index
    %3 = vector.load %arg2[%c0_3, %c0_4] : memref<512x128xbf16, #tpu.memory_space<vmem>>, vector<128x128xbf16>
    %c0_5 = arith.constant 0 : index
    %c0_6 = arith.constant 0 : index
    %4 = vector.load %arg6[%c0_5, %c0_6] : memref<8x512xf32, #tpu.memory_space<vmem>>, vector<1x128xf32>
    %5 = arith.truncf %2 : vector<16x128xf32> to vector<16x128xbf16>
    %cst = arith.constant dense<0.000000e+00> : vector<16x128xf32>
    %6 = tpu.matmul %0, %5, %cst {dimension_numbers = #tpu.dot_dimension_numbers<[1], [0], [0], [1], [0, 0, 1, 1], [], []>} : vector<16x16xbf16>, vector<16x128xbf16>, vector<16x128xf32> -> vector<16x128xf32>
    %7 = arith.truncf %6 : vector<16x128xf32> to vector<16x128xbf16>
    %cst_7 = arith.constant dense<0.000000e+00> : vector<16x128xf32>
    %8 = tpu.matmul %7, %3, %cst_7 {dimension_numbers = #tpu.dot_dimension_numbers<[1], [0], [0], [1], [0, 0, 1, 1], [], []>} : vector<16x128xbf16>, vector<128x128xbf16>, vector<16x128xf32> -> vector<16x128xf32>
    %9 = vector.broadcast %4 : vector<1x128xf32> to vector<16x128xf32>
    %10 = arith.addf %8, %9 : vector<16x128xf32>
    %cst_8 = arith.constant 0.000000e+00 : f32
    %11 = vector.broadcast %cst_8 : f32 to vector<16x128xf32>
    %12 = arith.maximumf %10, %11 : vector<16x128xf32>
    %c0_9 = arith.constant 0 : index
    %c0_10 = arith.constant 0 : index
    %13 = vector.load %arg3[%c0_9, %c0_10] : memref<128x256xbf16, #tpu.memory_space<vmem>>, vector<128x256xbf16>
    %c1 = arith.constant 1 : index
    %c0_11 = arith.constant 0 : index
    %14 = vector.load %arg6[%c1, %c0_11] : memref<8x512xf32, #tpu.memory_space<vmem>>, vector<1x256xf32>
    %15 = arith.truncf %12 : vector<16x128xf32> to vector<16x128xbf16>
    %cst_12 = arith.constant dense<0.000000e+00> : vector<16x128xf32>
    %16 = tpu.matmul %0, %15, %cst_12 {dimension_numbers = #tpu.dot_dimension_numbers<[1], [0], [0], [1], [0, 0, 1, 1], [], []>} : vector<16x16xbf16>, vector<16x128xbf16>, vector<16x128xf32> -> vector<16x128xf32>
    %17 = arith.truncf %16 : vector<16x128xf32> to vector<16x128xbf16>
    %cst_13 = arith.constant dense<0.000000e+00> : vector<16x256xf32>
    %18 = tpu.matmul %17, %13, %cst_13 {dimension_numbers = #tpu.dot_dimension_numbers<[1], [0], [0], [1], [0, 0, 1, 1], [], []>} : vector<16x128xbf16>, vector<128x256xbf16>, vector<16x256xf32> -> vector<16x256xf32>
    %19 = vector.broadcast %14 : vector<1x256xf32> to vector<16x256xf32>
    %20 = arith.addf %18, %19 : vector<16x256xf32>
    %cst_14 = arith.constant 0.000000e+00 : f32
    %21 = vector.broadcast %cst_14 : f32 to vector<16x256xf32>
    %22 = arith.maximumf %20, %21 : vector<16x256xf32>
    %c0_15 = arith.constant 0 : index
    %c0_16 = arith.constant 0 : index
    %23 = vector.load %arg4[%c0_15, %c0_16] : memref<256x512xbf16, #tpu.memory_space<vmem>>, vector<256x512xbf16>
    %c2 = arith.constant 2 : index
    %c0_17 = arith.constant 0 : index
    %24 = vector.load %arg6[%c2, %c0_17] : memref<8x512xf32, #tpu.memory_space<vmem>>, vector<1x512xf32>
    %25 = arith.truncf %22 : vector<16x256xf32> to vector<16x256xbf16>
    %cst_18 = arith.constant dense<0.000000e+00> : vector<16x256xf32>
    %26 = tpu.matmul %0, %25, %cst_18 {dimension_numbers = #tpu.dot_dimension_numbers<[1], [0], [0], [1], [0, 0, 1, 1], [], []>} : vector<16x16xbf16>, vector<16x256xbf16>, vector<16x256xf32> -> vector<16x256xf32>
    %27 = arith.truncf %26 : vector<16x256xf32> to vector<16x256xbf16>
    %cst_19 = arith.constant dense<0.000000e+00> : vector<16x512xf32>
    %28 = tpu.matmul %27, %23, %cst_19 {dimension_numbers = #tpu.dot_dimension_numbers<[1], [0], [0], [1], [0, 0, 1, 1], [], []>} : vector<16x256xbf16>, vector<256x512xbf16>, vector<16x512xf32> -> vector<16x512xf32>
    %29 = vector.broadcast %24 : vector<1x512xf32> to vector<16x512xf32>
    %30 = arith.addf %28, %29 : vector<16x512xf32>
    %cst_20 = arith.constant 0.000000e+00 : f32
    %31 = vector.broadcast %cst_20 : f32 to vector<16x512xf32>
    %32 = arith.maximumf %30, %31 : vector<16x512xf32>
    %c0_21 = arith.constant 0 : index
    %c0_22 = arith.constant 0 : index
    %33 = vector.load %arg5[%c0_21, %c0_22] : memref<512x256xbf16, #tpu.memory_space<vmem>>, vector<512x256xbf16>
    %c3 = arith.constant 3 : index
    %c0_23 = arith.constant 0 : index
    %34 = vector.load %arg6[%c3, %c0_23] : memref<8x512xf32, #tpu.memory_space<vmem>>, vector<1x256xf32>
    %35 = arith.truncf %32 : vector<16x512xf32> to vector<16x512xbf16>
    %cst_24 = arith.constant dense<0.000000e+00> : vector<16x256xf32>
    %36 = tpu.matmul %35, %33, %cst_24 {dimension_numbers = #tpu.dot_dimension_numbers<[1], [0], [0], [1], [0, 0, 1, 1], [], []>} : vector<16x512xbf16>, vector<512x256xbf16>, vector<16x256xf32> -> vector<16x256xf32>
    %37 = arith.truncf %36 : vector<16x256xf32> to vector<16x256xbf16>
    %cst_25 = arith.constant dense<0.000000e+00> : vector<16x256xf32>
    %38 = tpu.matmul %0, %37, %cst_25 {dimension_numbers = #tpu.dot_dimension_numbers<[1], [0], [0], [1], [0, 0, 1, 1], [], []>} : vector<16x16xbf16>, vector<16x256xbf16>, vector<16x256xf32> -> vector<16x256xf32>
    %39 = vector.broadcast %34 : vector<1x256xf32> to vector<16x256xf32>
    %40 = arith.addf %38, %39 : vector<16x256xf32>
    %cst_26 = arith.constant 0.000000e+00 : f32
    %41 = vector.broadcast %cst_26 : f32 to vector<16x256xf32>
    %42 = arith.maximumf %40, %41 : vector<16x256xf32>
    %c128 = arith.constant 128 : index
    %c0_27 = arith.constant 0 : index
    %43 = vector.load %arg2[%c128, %c0_27] : memref<512x128xbf16, #tpu.memory_space<vmem>>, vector<256x128xbf16>
    %c4 = arith.constant 4 : index
    %c0_28 = arith.constant 0 : index
    %44 = vector.load %arg6[%c4, %c0_28] : memref<8x512xf32, #tpu.memory_space<vmem>>, vector<1x128xf32>
    %45 = arith.truncf %42 : vector<16x256xf32> to vector<16x256xbf16>
    %cst_29 = arith.constant dense<0.000000e+00> : vector<16x128xf32>
    %46 = tpu.matmul %45, %43, %cst_29 {dimension_numbers = #tpu.dot_dimension_numbers<[1], [0], [0], [1], [0, 0, 1, 1], [], []>} : vector<16x256xbf16>, vector<256x128xbf16>, vector<16x128xf32> -> vector<16x128xf32>
    %47 = arith.truncf %46 : vector<16x128xf32> to vector<16x128xbf16>
    %cst_30 = arith.constant dense<0.000000e+00> : vector<16x128xf32>
    %48 = tpu.matmul %0, %47, %cst_30 {dimension_numbers = #tpu.dot_dimension_numbers<[1], [0], [0], [1], [0, 0, 1, 1], [], []>} : vector<16x16xbf16>, vector<16x128xbf16>, vector<16x128xf32> -> vector<16x128xf32>
    %49 = vector.broadcast %44 : vector<1x128xf32> to vector<16x128xf32>
    %50 = arith.addf %48, %49 : vector<16x128xf32>
    %cst_31 = arith.constant 0.000000e+00 : f32
    %51 = vector.broadcast %cst_31 : f32 to vector<16x128xf32>
    %52 = arith.maximumf %50, %51 : vector<16x128xf32>
    %c384 = arith.constant 384 : index
    %c0_32 = arith.constant 0 : index
    %53 = vector.load %arg2[%c384, %c0_32] : memref<512x128xbf16, #tpu.memory_space<vmem>>, vector<128x128xbf16>
    %c5 = arith.constant 5 : index
    %c0_33 = arith.constant 0 : index
    %54 = vector.load %arg6[%c5, %c0_33] : memref<8x512xf32, #tpu.memory_space<vmem>>, vector<1x128xf32>
    %55 = arith.truncf %52 : vector<16x128xf32> to vector<16x128xbf16>
    %cst_34 = arith.constant dense<0.000000e+00> : vector<16x128xf32>
    %56 = tpu.matmul %55, %53, %cst_34 {dimension_numbers = #tpu.dot_dimension_numbers<[1], [0], [0], [1], [0, 0, 1, 1], [], []>} : vector<16x128xbf16>, vector<128x128xbf16>, vector<16x128xf32> -> vector<16x128xf32>
    %57 = arith.truncf %56 : vector<16x128xf32> to vector<16x128xbf16>
    %cst_35 = arith.constant dense<0.000000e+00> : vector<16x128xf32>
    %58 = tpu.matmul %0, %57, %cst_35 {dimension_numbers = #tpu.dot_dimension_numbers<[1], [0], [0], [1], [0, 0, 1, 1], [], []>} : vector<16x16xbf16>, vector<16x128xbf16>, vector<16x128xf32> -> vector<16x128xf32>
    %59 = vector.broadcast %54 : vector<1x128xf32> to vector<16x128xf32>
    %60 = arith.addf %58, %59 : vector<16x128xf32>
    %c0_36 = arith.constant 0 : index
    %c0_37 = arith.constant 0 : index
    %61 = vector.load %arg7[%c0_36, %c0_37] : memref<16x128xf32, #tpu.memory_space<vmem>>, vector<16x128xf32>
    tpu.vector_store %arg7[%c0_36, %c0_37], %60 {strides = array<i32>} : memref<16x128xf32, #tpu.memory_space<vmem>>, vector<16x128xf32>,
    return
  }
}

</mosaic_0001>

<llo_original>
// kernel: _forward.1
$region0: #{_forward.1}
  #allocation0 [shape = 'u32[]', space=smem, size = 0x4, offset = 0x4, fixed_abs, tag = 'smem constant byte address 0x4 - core index']
  #allocation1 [shape = 'u32[72,128]{1,0:T(1,128)}', space=vmem, size = 0x9000, scoped, tag = 'internal scratch']
  %s0 = inlined_call_operand.vmem [shape: bf16[16,16], index: 0, kind: input, shape index: {}]
  %s1 = inlined_call_operand.vmem [shape: bf16[16,128], index: 1, kind: input, shape index: {}]
  %s2 = inlined_call_operand.vmem [shape: bf16[512,128], index: 2, kind: input, shape index: {}]
  %s3 = inlined_call_operand.vmem [shape: bf16[128,256], index: 3, kind: input, shape index: {}]
  %s4 = inlined_call_operand.vmem [shape: bf16[256,512], index: 4, kind: input, shape index: {}]
  %s5 = inlined_call_operand.vmem [shape: bf16[512,256], index: 5, kind: input, shape index: {}]
  %s6 = inlined_call_operand.vmem [shape: f32[8,512], index: 6, kind: input, shape index: {}]
  %s7 = inlined_call_operand.vmem [shape: f32[16,128], index: 7, kind: output, shape index: {}]
  %s8 = sld [smem:[#allocation0]]
  $region38: #{_forward.1} parent=0
    _
  %s10 = ssub.s32 1, %s8
  %s11 = scalar_select 0, %s10, %s8
  // Predicated region
  $region2: #{_forward.1} parent=0 // pred_check
    _
  $region3: #{_forward.1} parent=0 // pred_check_branch
    %13 = sbr.rel (0) target = $region5
  $region4: #{_forward.1} parent=0 // pred_region
    _
  $region5: #{_forward.1} parent=0 // pred_fallthru
    _
  // Predicated region
  $region6: #{_forward.1} parent=0 // pred_check
    _
  $region7: #{_forward.1} parent=0 // pred_check_branch
    %15 = sbr.rel (0) target = $region9
  $region8: #{_forward.1} parent=0 // pred_region
    _
  $region9: #{_forward.1} parent=0 // pred_fallthru
    _
  // Predicated region
  $region10: #{_forward.1} parent=0 // pred_check
    _
  $region11: #{_forward.1} parent=0 // pred_check_branch
    %17 = sbr.rel (0) target = $region13
  $region12: #{_forward.1} parent=0 // pred_region
    _
  $region13: #{_forward.1} parent=0 // pred_fallthru
    _
  // Predicated region
  $region14: #{_forward.1} parent=0 // pred_check
    _
  $region15: #{_forward.1} parent=0 // pred_check_branch
    %19 = sbr.rel (0) target = $region17
  $region16: #{_forward.1} parent=0 // pred_region
    _
  $region17: #{_forward.1} parent=0 // pred_fallthru
    _
  // Predicated region
  $region18: #{_forward.1} parent=0 // pred_check
    _
  $region19: #{_forward.1} parent=0 // pred_check_branch
    %21 = sbr.rel (0) target = $region21
  $region20: #{_forward.1} parent=0 // pred_region
    _
  $region21: #{_forward.1} parent=0 // pred_fallthru
    _
  // Predicated region
  $region22: #{_forward.1} parent=0 // pred_check
    _
  $region23: #{_forward.1} parent=0 // pred_check_branch
    %23 = sbr.rel (0) target = $region25
  $region24: #{_forward.1} parent=0 // pred_region
    _
  $region25: #{_forward.1} parent=0 // pred_fallthru
    _
  // Predicated region
  $region26: #{_forward.1} parent=0 // pred_check
    _
  $region27: #{_forward.1} parent=0 // pred_check_branch
    %25 = sbr.rel (0) target = $region29
  $region28: #{_forward.1} parent=0 // pred_region
    _
  $region29: #{_forward.1} parent=0 // pred_fallthru
    _
  %v27 = vld [vmem:[%s0] sm:$0xf]
  %v28 = vld [vmem:[%s0 + $0x4] sm:$0xf]
  %v29 = vld [vmem:[%s1] sm:$0xf]
  %v30 = vld [vmem:[%s1 + $0x4] sm:$0xf]
  %v31 = vld [vmem:[%s2] sm:$0xf]
  %v32 = vld [vmem:[%s2 + $0x4] sm:$0xf]
  %v33 = vld [vmem:[%s2 + $0x8] sm:$0xf]
  %v34 = vld [vmem:[%s2 + $0xc] sm:$0xf]
  %v35 = vld [vmem:[%s2 + $0x10] sm:$0xf]
  %v36 = vld [vmem:[%s2 + $0x14] sm:$0xf]
  %v37 = vld [vmem:[%s2 + $0x18] sm:$0xf]
  %v38 = vld [vmem:[%s2 + $0x1c] sm:$0xf]
  %v39 = vld [vmem:[%s2 + $0x20] sm:$0xf]
  %v40 = vld [vmem:[%s2 + $0x24] sm:$0xf]
  %v41 = vld [vmem:[%s2 + $0x28] sm:$0xf]
  %v42 = vld [vmem:[%s2 + $0x2c] sm:$0xf]
  %v43 = vld [vmem:[%s2 + $0x30] sm:$0xf]
  %v44 = vld [vmem:[%s2 + $0x34] sm:$0xf]
  %v45 = vld [vmem:[%s2 + $0x38] sm:$0xf]
  %v46 = vld [vmem:[%s2 + $0x3c] sm:$0xf]
  %v47 = vld [vmem:[%s6] ss:$0 sm:$0xff]
  %v50 = vunpack.c.l.b16 %v27
  %v51 = vunpack.c.l.b16 %v28
  %v52 = vpack.c.b16 %v51, %v50
  %v55 = vunpack.c.l.b16 %v29
  %v56 = vunpack.c.l.b16 %v30
  %v57 = vpack.c.b16 %v56, %v55
  %vm59 = vcmask 130048
  %v61 = vsel %vm59, %v52, 0
  %63 = vmatpush.bf16.msra.mxu0 0
  %64 = vmatpush.bf16.msra.mxu0 0
  %65 = vmatpush.bf16.msra.mxu0 0
  %66 = vmatpush.bf16.msra.mxu0 0
  %67 = vmatpush.bf16.msra.mxu0 0
  %68 = vmatpush.bf16.msra.mxu0 0
  %69 = vmatpush.bf16.msra.mxu0 0
  %70 = vmatpush.bf16.msra.mxu0 %v57
  %71 = vmatmul.bf16.gmra.mxu0 %v61
  %v72 = vpop.f32.mrf.mxu0
  %v73 = vadd.f32 0.0, %v72
  %v74 = vpop.f32.mrf.mxu0
  %v75 = vadd.f32 0.0, %v74
  %76 = vdwg.mxu0
  %v77 = vpack.c.bf16 %v75, %v73
  %v94 = vunpack.c.l.b16 %v31
  %v95 = vunpack.c.l.b16 %v32
  %v96 = vunpack.c.l.b16 %v33
  %v97 = vunpack.c.l.b16 %v34
  %v98 = vunpack.c.l.b16 %v35
  %v99 = vunpack.c.l.b16 %v36
  %v100 = vunpack.c.l.b16 %v37
  %v101 = vunpack.c.l.b16 %v38
  %v102 = vunpack.c.l.b16 %v39
  %v103 = vunpack.c.l.b16 %v40
  %v104 = vunpack.c.l.b16 %v41
  %v105 = vunpack.c.l.b16 %v42
  %v106 = vunpack.c.l.b16 %v43
  %v107 = vunpack.c.l.b16 %v44
  %v108 = vunpack.c.l.b16 %v45
  %v109 = vunpack.c.l.b16 %v46
  %v110 = vpack.c.b16 %v95, %v94
  %v111 = vpack.c.b16 %v97, %v96
  %v112 = vpack.c.b16 %v99, %v98
  %v113 = vpack.c.b16 %v101, %v100
  %v114 = vpack.c.b16 %v103, %v102
  %v115 = vpack.c.b16 %v105, %v104
  %v116 = vpack.c.b16 %v107, %v106
  %v117 = vpack.c.b16 %v109, %v108
  %126 = vmatpush.bf16.msra.mxu0 %v117
  %127 = vmatpush.bf16.msra.mxu0 %v116
  %128 = vmatpush.bf16.msra.mxu0 %v115
  %129 = vmatpush.bf16.msra.mxu0 %v114
  %130 = vmatpush.bf16.msra.mxu0 %v113
  %131 = vmatpush.bf16.msra.mxu0 %v112
  %132 = vmatpush.bf16.msra.mxu0 %v111
  %133 = vmatpush.bf16.msra.mxu0 %v110
  %134 = vmatmul.bf16.gmra.mxu0 %v77
  %v135 = vpop.f32.mrf.mxu0
  %v136 = vadd.f32 %v47, %v135
  %v137 = vpop.f32.mrf.mxu0
  %v138 = vadd.f32 %v47, %v137
  %139 = vdwg.mxu0
  %v140 = vmax.f32 %v136, 0.0
  %v141 = vmax.f32 %v138, 0.0
  %v142 = vld [vmem:[%s3] sm:$0xff]
  %v143 = vld [vmem:[%s3 + $0x8] sm:$0xff]
  %v144 = vld [vmem:[%s3 + $0x10] sm:$0xff]
  %v145 = vld [vmem:[%s3 + $0x18] sm:$0xff]
  %v146 = vld [vmem:[%s3 + $0x20] sm:$0xff]
  %v147 = vld [vmem:[%s3 + $0x28] sm:$0xff]
  %v148 = vld [vmem:[%s3 + $0x30] sm:$0xff]
  %v149 = vld [vmem:[%s3 + $0x38] sm:$0xff]
  %v150 = vld [vmem:[%s3 + $0x40] sm:$0xff]
  %v151 = vld [vmem:[%s3 + $0x48] sm:$0xff]
  %v152 = vld [vmem:[%s3 + $0x50] sm:$0xff]
  %v153 = vld [vmem:[%s3 + $0x58] sm:$0xff]
  %v154 = vld [vmem:[%s3 + $0x60] sm:$0xff]
  %v155 = vld [vmem:[%s3 + $0x68] sm:$0xff]
  %v156 = vld [vmem:[%s3 + $0x70] sm:$0xff]
  %v157 = vld [vmem:[%s3 + $0x78] sm:$0xff]
  %s158 = scalar_lea.vmem %s6, 1
  %v159 = vld [vmem:[%s158] ss:$8 sm:$0x3]
  %v160 = vpack.c.bf16 %v141, %v140
  %161 = vmatpush.bf16.msra.mxu0 0
  %162 = vmatpush.bf16.msra.mxu0 0
  %163 = vmatpush.bf16.msra.mxu0 0
  %164 = vmatpush.bf16.msra.mxu0 0
  %165 = vmatpush.bf16.msra.mxu0 0
  %166 = vmatpush.bf16.msra.mxu0 0
  %167 = vmatpush.bf16.msra.mxu0 0
  %168 = vmatpush.bf16.msra.mxu0 %v160
  %169 = vmatmul.bf16.gmra.mxu0 %v61
  %v170 = vpop.f32.mrf.mxu0
  %v171 = vadd.f32 0.0, %v170
  %v172 = vpop.f32.mrf.mxu0
  %v173 = vadd.f32 0.0, %v172
  %174 = vdwg.mxu0
  %v175 = vpack.c.bf16 %v173, %v171
  %v177 = vperm.slane %v159, 0
  %v178 = vperm.slane %v159, 1
  %v197 = vunpack.c.l.b16 %v142
  %v198 = vunpack.c.h.b16 %v142
  %v199 = vunpack.c.l.b16 %v143
  %v200 = vunpack.c.h.b16 %v143
  %v201 = vunpack.c.l.b16 %v144
  %v202 = vunpack.c.h.b16 %v144
  %v203 = vunpack.c.l.b16 %v145
  %v204 = vunpack.c.h.b16 %v145
  %v205 = vunpack.c.l.b16 %v146
  %v206 = vunpack.c.h.b16 %v146
  %v207 = vunpack.c.l.b16 %v147
  %v208 = vunpack.c.h.b16 %v147
  %v209 = vunpack.c.l.b16 %v148
  %v210 = vunpack.c.h.b16 %v148
  %v211 = vunpack.c.l.b16 %v149
  %v212 = vunpack.c.h.b16 %v149
  %v213 = vunpack.c.l.b16 %v150
  %v214 = vunpack.c.h.b16 %v150
  %v215 = vunpack.c.l.b16 %v151
  %v216 = vunpack.c.h.b16 %v151
  %v217 = vunpack.c.l.b16 %v152
  %v218 = vunpack.c.h.b16 %v152
  %v219 = vunpack.c.l.b16 %v153
  %v220 = vunpack.c.h.b16 %v153
  %v221 = vunpack.c.l.b16 %v154
  %v222 = vunpack.c.h.b16 %v154
  %v223 = vunpack.c.l.b16 %v155
  %v224 = vunpack.c.h.b16 %v155
  %v225 = vunpack.c.l.b16 %v156
  %v226 = vunpack.c.h.b16 %v156
  %v227 = vunpack.c.l.b16 %v157
  %v228 = vunpack.c.h.b16 %v157
  %v229 = vpack.c.b16 %v199, %v197
  %v230 = vpack.c.b16 %v200, %v198
  %v231 = vpack.c.b16 %v203, %v201
  %v232 = vpack.c.b16 %v204, %v202
  %v233 = vpack.c.b16 %v207, %v205
  %v234 = vpack.c.b16 %v208, %v206
  %v235 = vpack.c.b16 %v211, %v209
  %v236 = vpack.c.b16 %v212, %v210
  %v237 = vpack.c.b16 %v215, %v213
  %v238 = vpack.c.b16 %v216, %v214
  %v239 = vpack.c.b16 %v219, %v217
  %v240 = vpack.c.b16 %v220, %v218
  %v241 = vpack.c.b16 %v223, %v221
  %v242 = vpack.c.b16 %v224, %v222
  %v243 = vpack.c.b16 %v227, %v225
  %v244 = vpack.c.b16 %v228, %v226
  %261 = vmatpush.bf16.msra.mxu0 %v243
  %262 = vmatpush.bf16.msra.mxu0 %v241
  %263 = vmatpush.bf16.msra.mxu0 %v239
  %264 = vmatpush.bf16.msra.mxu0 %v237
  %265 = vmatpush.bf16.msra.mxu0 %v235
  %266 = vmatpush.bf16.msra.mxu0 %v233
  %267 = vmatpush.bf16.msra.mxu0 %v231
  %268 = vmatpush.bf16.msra.mxu0 %v229
  %269 = vmatmul.bf16.gmra.mxu0 %v175
  %v270 = vpop.f32.mrf.mxu0
  %v271 = vadd.f32 %v177, %v270
  %v272 = vpop.f32.mrf.mxu0
  %v273 = vadd.f32 %v177, %v272
  %274 = vdwg.mxu0
  %275 = vmatpush.bf16.msra.mxu0 %v244
  %276 = vmatpush.bf16.msra.mxu0 %v242
  %277 = vmatpush.bf16.msra.mxu0 %v240
  %278 = vmatpush.bf16.msra.mxu0 %v238
  %279 = vmatpush.bf16.msra.mxu0 %v236
  %280 = vmatpush.bf16.msra.mxu0 %v234
  %281 = vmatpush.bf16.msra.mxu0 %v232
  %282 = vmatpush.bf16.msra.mxu0 %v230
  %283 = vmatmul.bf16.gmra.mxu0 %v175
  %v284 = vpop.f32.mrf.mxu0
  %v285 = vadd.f32 %v178, %v284
  %v286 = vpop.f32.mrf.mxu0
  %v287 = vadd.f32 %v178, %v286
  %288 = vdwg.mxu0
  %v289 = vmax.f32 %v271, 0.0
  %v290 = vmax.f32 %v285, 0.0
  %v291 = vmax.f32 %v273, 0.0
  %v292 = vmax.f32 %v287, 0.0
  %v293 = vld [vmem:[%s4] sm:$0xff]
  %v294 = vld [vmem:[%s4 + $0x8] sm:$0xff]
  %v295 = vld [vmem:[%s4 + $0x10] sm:$0xff]
  %v296 = vld [vmem:[%s4 + $0x18] sm:$0xff]
  %v297 = vld [vmem:[%s4 + $0x20] sm:$0xff]
  %v298 = vld [vmem:[%s4 + $0x28] sm:$0xff]
  %v299 = vld [vmem:[%s4 + $0x30] sm:$0xff]
  %v300 = vld [vmem:[%s4 + $0x38] sm:$0xff]
  %v301 = vld [vmem:[%s4 + $0x40] sm:$0xff]
  %v302 = vld [vmem:[%s4 + $0x48] sm:$0xff]
  %v303 = vld [vmem:[%s4 + $0x50] sm:$0xff]
  %v304 = vld [vmem:[%s4 + $0x58] sm:$0xff]
  %v305 = vld [vmem:[%s4 + $0x60] sm:$0xff]
  %v306 = vld [vmem:[%s4 + $0x68] sm:$0xff]
  %v307 = vld [vmem:[%s4 + $0x70] sm:$0xff]
  %v308 = vld [vmem:[%s4 + $0x78] sm:$0xff]
  %v309 = vld [vmem:[%s4 + $0x80] sm:$0xff]
  %v310 = vld [vmem:[%s4 + $0x88] sm:$0xff]
  %v311 = vld [vmem:[%s4 + $0x90] sm:$0xff]
  %v312 = vld [vmem:[%s4 + $0x98] sm:$0xff]
  %v313 = vld [vmem:[%s4 + $0xa0] sm:$0xff]
  %v314 = vld [vmem:[%s4 + $0xa8] sm:$0xff]
  %v315 = vld [vmem:[%s4 + $0xb0] sm:$0xff]
  %v316 = vld [vmem:[%s4 + $0xb8] sm:$0xff]
  %v317 = vld [vmem:[%s4 + $0xc0] sm:$0xff]
  %v318 = vld [vmem:[%s4 + $0xc8] sm:$0xff]
  %v319 = vld [vmem:[%s4 + $0xd0] sm:$0xff]
  %v320 = vld [vmem:[%s4 + $0xd8] sm:$0xff]
  %v321 = vld [vmem:[%s4 + $0xe0] sm:$0xff]
  %v322 = vld [vmem:[%s4 + $0xe8] sm:$0xff]
  %v323 = vld [vmem:[%s4 + $0xf0] sm:$0xff]
  %v324 = vld [vmem:[%s4 + $0xf8] sm:$0xff]
  %v325 = vld [vmem:[%s4 + $0x100] sm:$0xff]
  %v326 = vld [vmem:[%s4 + $0x108] sm:$0xff]
  %v327 = vld [vmem:[%s4 + $0x110] sm:$0xff]
  %v328 = vld [vmem:[%s4 + $0x118] sm:$0xff]
  %v329 = vld [vmem:[%s4 + $0x120] sm:$0xff]
  %v330 = vld [vmem:[%s4 + $0x128] sm:$0xff]
  %v331 = vld [vmem:[%s4 + $0x130] sm:$0xff]
  %v332 = vld [vmem:[%s4 + $0x138] sm:$0xff]
  %v333 = vld [vmem:[%s4 + $0x140] sm:$0xff]
  %v334 = vld [vmem:[%s4 + $0x148] sm:$0xff]
  %v335 = vld [vmem:[%s4 + $0x150] sm:$0xff]
  %v336 = vld [vmem:[%s4 + $0x158] sm:$0xff]
  %v337 = vld [vmem:[%s4 + $0x160] sm:$0xff]
  %v338 = vld [vmem:[%s4 + $0x168] sm:$0xff]
  %v339 = vld [vmem:[%s4 + $0x170] sm:$0xff]
  %v340 = vld [vmem:[%s4 + $0x178] sm:$0xff]
  %v341 = vld [vmem:[%s4 + $0x180] sm:$0xff]
  %v342 = vld [vmem:[%s4 + $0x188] sm:$0xff]
  %v343 = vld [vmem:[%s4 + $0x190] sm:$0xff]
  %v344 = vld [vmem:[%s4 + $0x198] sm:$0xff]
  %v345 = vld [vmem:[%s4 + $0x1a0] sm:$0xff]
  %v346 = vld [vmem:[%s4 + $0x1a8] sm:$0xff]
  %v347 = vld [vmem:[%s4 + $0x1b0] sm:$0xff]
  %v348 = vld [vmem:[%s4 + $0x1b8] sm:$0xff]
  %v349 = vld [vmem:[%s4 + $0x1c0] sm:$0xff]
  %v350 = vld [vmem:[%s4 + $0x1c8] sm:$0xff]
  %v351 = vld [vmem:[%s4 + $0x1d0] sm:$0xff]
  %v352 = vld [vmem:[%s4 + $0x1d8] sm:$0xff]
  %v353 = vld [vmem:[%s4 + $0x1e0] sm:$0xff]
  %v354 = vld [vmem:[%s4 + $0x1e8] sm:$0xff]
  %v355 = vld [vmem:[%s4 + $0x1f0] sm:$0xff]
  %v356 = vld [vmem:[%s4 + $0x1f8] sm:$0xff]
  %s357 = scalar_lea.vmem %s6, 2
  %v358 = vld [vmem:[%s357] ss:$8 sm:$0xf]
  %v359 = vpack.c.bf16 %v291, %v289
  %v360 = vpack.c.bf16 %v292, %v290
  %361 = vmatpush.bf16.msra.mxu0 0
  %362 = vmatpush.bf16.msra.mxu0 0
  %363 = vmatpush.bf16.msra.mxu0 0
  %364 = vmatpush.bf16.msra.mxu0 0
  %365 = vmatpush.bf16.msra.mxu0 0
  %366 = vmatpush.bf16.msra.mxu0 0
  %367 = vmatpush.bf16.msra.mxu0 0
  %368 = vmatpush.bf16.msra.mxu0 %v359
  %369 = vmatmul.bf16.gmra.mxu0 %v61
  %v370 = vpop.f32.mrf.mxu0
  %v371 = vadd.f32 0.0, %v370
  %v372 = vpop.f32.mrf.mxu0
  %v373 = vadd.f32 0.0, %v372
  %374 = vdwg.mxu0
  %375 = vmatpush.bf16.msra.mxu0 0
  %376 = vmatpush.bf16.msra.mxu0 0
  %377 = vmatpush.bf16.msra.mxu0 0
  %378 = vmatpush.bf16.msra.mxu0 0
  %379 = vmatpush.bf16.msra.mxu0 0
  %380 = vmatpush.bf16.msra.mxu0 0
  %381 = vmatpush.bf16.msra.mxu0 0
  %382 = vmatpush.bf16.msra.mxu0 %v360
  %383 = vmatmul.bf16.gmra.mxu0 %v61
  %v384 = vpop.f32.mrf.mxu0
  %v385 = vadd.f32 0.0, %v384
  %v386 = vpop.f32.mrf.mxu0
  %v387 = vadd.f32 0.0, %v386
  %388 = vdwg.mxu0
  %v389 = vpack.c.bf16 %v373, %v371
  %v390 = vpack.c.bf16 %v387, %v385
  %v392 = vperm.slane %v358, 0
  %v393 = vperm.slane %v358, 1
  %v394 = vperm.slane %v358, 2
  %v395 = vperm.slane %v358, 3
  %v464 = vunpack.c.l.b16 %v293
  %v465 = vunpack.c.h.b16 %v293
  %v466 = vunpack.c.l.b16 %v294
  %v467 = vunpack.c.h.b16 %v294
  %v468 = vunpack.c.l.b16 %v295
  %v469 = vunpack.c.h.b16 %v295
  %v470 = vunpack.c.l.b16 %v296
  %v471 = vunpack.c.h.b16 %v296
  %v472 = vunpack.c.l.b16 %v297
  %v473 = vunpack.c.h.b16 %v297
  %v474 = vunpack.c.l.b16 %v298
  %v475 = vunpack.c.h.b16 %v298
  %v476 = vunpack.c.l.b16 %v299
  %v477 = vunpack.c.h.b16 %v299
  %v478 = vunpack.c.l.b16 %v300
  %v479 = vunpack.c.h.b16 %v300
  %v480 = vunpack.c.l.b16 %v301
  %v481 = vunpack.c.h.b16 %v301
  %v482 = vunpack.c.l.b16 %v302
  %v483 = vunpack.c.h.b16 %v302
  %v484 = vunpack.c.l.b16 %v303
  %v485 = vunpack.c.h.b16 %v303
  %v486 = vunpack.c.l.b16 %v304
  %v487 = vunpack.c.h.b16 %v304
  %v488 = vunpack.c.l.b16 %v305
  %v489 = vunpack.c.h.b16 %v305
  %v490 = vunpack.c.l.b16 %v306
  %v491 = vunpack.c.h.b16 %v306
  %v492 = vunpack.c.l.b16 %v307
  %v493 = vunpack.c.h.b16 %v307
  %v494 = vunpack.c.l.b16 %v308
  %v495 = vunpack.c.h.b16 %v308
  %v496 = vunpack.c.l.b16 %v309
  %v497 = vunpack.c.h.b16 %v309
  %v498 = vunpack.c.l.b16 %v310
  %v499 = vunpack.c.h.b16 %v310
  %v500 = vunpack.c.l.b16 %v311
  %v501 = vunpack.c.h.b16 %v311
  %v502 = vunpack.c.l.b16 %v312
  %v503 = vunpack.c.h.b16 %v312
  %v504 = vunpack.c.l.b16 %v313
  %v505 = vunpack.c.h.b16 %v313
  %v506 = vunpack.c.l.b16 %v314
  %v507 = vunpack.c.h.b16 %v314
  %v508 = vunpack.c.l.b16 %v315
  %v509 = vunpack.c.h.b16 %v315
  %v510 = vunpack.c.l.b16 %v316
  %v511 = vunpack.c.h.b16 %v316
  %v512 = vunpack.c.l.b16 %v317
  %v513 = vunpack.c.h.b16 %v317
  %v514 = vunpack.c.l.b16 %v318
  %v515 = vunpack.c.h.b16 %v318
  %v516 = vunpack.c.l.b16 %v319
  %v517 = vunpack.c.h.b16 %v319
  %v518 = vunpack.c.l.b16 %v320
  %v519 = vunpack.c.h.b16 %v320
  %v520 = vunpack.c.l.b16 %v321
  %v521 = vunpack.c.h.b16 %v321
  %v522 = vunpack.c.l.b16 %v322
  %v523 = vunpack.c.h.b16 %v322
  %v524 = vunpack.c.l.b16 %v323
  %v525 = vunpack.c.h.b16 %v323
  %v526 = vunpack.c.l.b16 %v324
  %v527 = vunpack.c.h.b16 %v324
  %v528 = vunpack.c.l.b16 %v325
  %v529 = vunpack.c.h.b16 %v325
  %v530 = vunpack.c.l.b16 %v326
  %v531 = vunpack.c.h.b16 %v326
  %v532 = vunpack.c.l.b16 %v327
  %v533 = vunpack.c.h.b16 %v327
  %v534 = vunpack.c.l.b16 %v328
  %v535 = vunpack.c.h.b16 %v328
  %v536 = vunpack.c.l.b16 %v329
  %v537 = vunpack.c.h.b16 %v329
  %v538 = vunpack.c.l.b16 %v330
  %v539 = vunpack.c.h.b16 %v330
  %v540 = vunpack.c.l.b16 %v331
  %v541 = vunpack.c.h.b16 %v331
  %v542 = vunpack.c.l.b16 %v332
  %v543 = vunpack.c.h.b16 %v332
  %v544 = vunpack.c.l.b16 %v333
  %v545 = vunpack.c.h.b16 %v333
  %v546 = vunpack.c.l.b16 %v334
  %v547 = vunpack.c.h.b16 %v334
  %v548 = vunpack.c.l.b16 %v335
  %v549 = vunpack.c.h.b16 %v335
  %v550 = vunpack.c.l.b16 %v336
  %v551 = vunpack.c.h.b16 %v336
  %v552 = vunpack.c.l.b16 %v337
  %v553 = vunpack.c.h.b16 %v337
  %v554 = vunpack.c.l.b16 %v338
  %v555 = vunpack.c.h.b16 %v338
  %v556 = vunpack.c.l.b16 %v339
  %v557 = vunpack.c.h.b16 %v339
  %v558 = vunpack.c.l.b16 %v340
  %v559 = vunpack.c.h.b16 %v340
  %v560 = vunpack.c.l.b16 %v341
  %v561 = vunpack.c.h.b16 %v341
  %v562 = vunpack.c.l.b16 %v342
  %v563 = vunpack.c.h.b16 %v342
  %v564 = vunpack.c.l.b16 %v343
  %v565 = vunpack.c.h.b16 %v343
  %v566 = vunpack.c.l.b16 %v344
  %v567 = vunpack.c.h.b16 %v344
  %v568 = vunpack.c.l.b16 %v345
  %v569 = vunpack.c.h.b16 %v345
  %v570 = vunpack.c.l.b16 %v346
  %v571 = vunpack.c.h.b16 %v346
  %v572 = vunpack.c.l.b16 %v347
  %v573 = vunpack.c.h.b16 %v347
  %v574 = vunpack.c.l.b16 %v348
  %v575 = vunpack.c.h.b16 %v348
  %v576 = vunpack.c.l.b16 %v349
  %v577 = vunpack.c.h.b16 %v349
  %v578 = vunpack.c.l.b16 %v350
  %v579 = vunpack.c.h.b16 %v350
  %v580 = vunpack.c.l.b16 %v351
  %v581 = vunpack.c.h.b16 %v351
  %v582 = vunpack.c.l.b16 %v352
  %v583 = vunpack.c.h.b16 %v352
  %v584 = vunpack.c.l.b16 %v353
  %v585 = vunpack.c.h.b16 %v353
  %v586 = vunpack.c.l.b16 %v354
  %v587 = vunpack.c.h.b16 %v354
  %v588 = vunpack.c.l.b16 %v355
  %v589 = vunpack.c.h.b16 %v355
  %v590 = vunpack.c.l.b16 %v356
  %v591 = vunpack.c.h.b16 %v356
  %v592 = vpack.c.b16 %v468, %v464
  %v593 = vpack.c.b16 %v469, %v465
  %v594 = vpack.c.b16 %v470, %v466
  %v595 = vpack.c.b16 %v471, %v467
  %v596 = vpack.c.b16 %v476, %v472
  %v597 = vpack.c.b16 %v477, %v473
  %v598 = vpack.c.b16 %v478, %v474
  %v599 = vpack.c.b16 %v479, %v475
  %v600 = vpack.c.b16 %v484, %v480
  %v601 = vpack.c.b16 %v485, %v481
  %v602 = vpack.c.b16 %v486, %v482
  %v603 = vpack.c.b16 %v487, %v483
  %v604 = vpack.c.b16 %v492, %v488
  %v605 = vpack.c.b16 %v493, %v489
  %v606 = vpack.c.b16 %v494, %v490
  %v607 = vpack.c.b16 %v495, %v491
  %v608 = vpack.c.b16 %v500, %v496
  %v609 = vpack.c.b16 %v501, %v497
  %v610 = vpack.c.b16 %v502, %v498
  %v611 = vpack.c.b16 %v503, %v499
  %v612 = vpack.c.b16 %v508, %v504
  %v613 = vpack.c.b16 %v509, %v505
  %v614 = vpack.c.b16 %v510, %v506
  %v615 = vpack.c.b16 %v511, %v507
  %v616 = vpack.c.b16 %v516, %v512
  %v617 = vpack.c.b16 %v517, %v513
  %v618 = vpack.c.b16 %v518, %v514
  %v619 = vpack.c.b16 %v519, %v515
  %v620 = vpack.c.b16 %v524, %v520
  %v621 = vpack.c.b16 %v525, %v521
  %v622 = vpack.c.b16 %v526, %v522
  %v623 = vpack.c.b16 %v527, %v523
  %v624 = vpack.c.b16 %v532, %v528
  %v625 = vpack.c.b16 %v533, %v529
  %v626 = vpack.c.b16 %v534, %v530
  %v627 = vpack.c.b16 %v535, %v531
  %v628 = vpack.c.b16 %v540, %v536
  %v629 = vpack.c.b16 %v541, %v537
  %v630 = vpack.c.b16 %v542, %v538
  %v631 = vpack.c.b16 %v543, %v539
  %v632 = vpack.c.b16 %v548, %v544
  %v633 = vpack.c.b16 %v549, %v545
  %v634 = vpack.c.b16 %v550, %v546
  %v635 = vpack.c.b16 %v551, %v547
  %v636 = vpack.c.b16 %v556, %v552
  %v637 = vpack.c.b16 %v557, %v553
  %v638 = vpack.c.b16 %v558, %v554
  %v639 = vpack.c.b16 %v559, %v555
  %v640 = vpack.c.b16 %v564, %v560
  %v641 = vpack.c.b16 %v565, %v561
  %v642 = vpack.c.b16 %v566, %v562
  %v643 = vpack.c.b16 %v567, %v563
  %v644 = vpack.c.b16 %v572, %v568
  %v645 = vpack.c.b16 %v573, %v569
  %v646 = vpack.c.b16 %v574, %v570
  %v647 = vpack.c.b16 %v575, %v571
  %v648 = vpack.c.b16 %v580, %v576
  %v649 = vpack.c.b16 %v581, %v577
  %v650 = vpack.c.b16 %v582, %v578
  %v651 = vpack.c.b16 %v583, %v579
  %v652 = vpack.c.b16 %v588, %v584
  %v653 = vpack.c.b16 %v589, %v585
  %v654 = vpack.c.b16 %v590, %v586
  %v655 = vpack.c.b16 %v591, %v587
  %720 = vmatpush.bf16.msra.mxu0 %v620
  %721 = vmatpush.bf16.msra.mxu0 %v616
  %722 = vmatpush.bf16.msra.mxu0 %v612
  %723 = vmatpush.bf16.msra.mxu0 %v608
  %724 = vmatpush.bf16.msra.mxu0 %v604
  %725 = vmatpush.bf16.msra.mxu0 %v600
  %726 = vmatpush.bf16.msra.mxu0 %v596
  %727 = vmatpush.bf16.msra.mxu0 %v592
  %728 = vmatmul.bf16.gmra.mxu0 %v389
  %v729 = vpop.f32.mrf.mxu0
  %v730 = vadd.f32 %v392, %v729
  %v731 = vpop.f32.mrf.mxu0
  %v732 = vadd.f32 %v392, %v731
  %733 = vdwg.mxu0
  %734 = vmatpush.bf16.msra.mxu0 %v652
  %735 = vmatpush.bf16.msra.mxu0 %v648
  %736 = vmatpush.bf16.msra.mxu0 %v644
  %737 = vmatpush.bf16.msra.mxu0 %v640
  %738 = vmatpush.bf16.msra.mxu0 %v636
  %739 = vmatpush.bf16.msra.mxu0 %v632
  %740 = vmatpush.bf16.msra.mxu0 %v628
  %741 = vmatpush.bf16.msra.mxu0 %v624
  %742 = vmatmul.bf16.gmra.mxu0 %v390
  %v743 = vpop.f32.mrf.mxu0
  %v744 = vadd.f32 %v730, %v743
  %v745 = vpop.f32.mrf.mxu0
  %v746 = vadd.f32 %v732, %v745
  %747 = vdwg.mxu0
  %748 = vmatpush.bf16.msra.mxu0 %v621
  %749 = vmatpush.bf16.msra.mxu0 %v617
  %750 = vmatpush.bf16.msra.mxu0 %v613
  %751 = vmatpush.bf16.msra.mxu0 %v609
  %752 = vmatpush.bf16.msra.mxu0 %v605
  %753 = vmatpush.bf16.msra.mxu0 %v601
  %754 = vmatpush.bf16.msra.mxu0 %v597
  %755 = vmatpush.bf16.msra.mxu0 %v593
  %756 = vmatmul.bf16.gmra.mxu0 %v389
  %v757 = vpop.f32.mrf.mxu0
  %v758 = vadd.f32 %v393, %v757
  %v759 = vpop.f32.mrf.mxu0
  %v760 = vadd.f32 %v393, %v759
  %761 = vdwg.mxu0
  %762 = vmatpush.bf16.msra.mxu0 %v653
  %763 = vmatpush.bf16.msra.mxu0 %v649
  %764 = vmatpush.bf16.msra.mxu0 %v645
  %765 = vmatpush.bf16.msra.mxu0 %v641
  %766 = vmatpush.bf16.msra.mxu0 %v637
  %767 = vmatpush.bf16.msra.mxu0 %v633
  %768 = vmatpush.bf16.msra.mxu0 %v629
  %769 = vmatpush.bf16.msra.mxu0 %v625
  %770 = vmatmul.bf16.gmra.mxu0 %v390
  %v771 = vpop.f32.mrf.mxu0
  %v772 = vadd.f32 %v758, %v771
  %v773 = vpop.f32.mrf.mxu0
  %v774 = vadd.f32 %v760, %v773
  %775 = vdwg.mxu0
  %776 = vmatpush.bf16.msra.mxu0 %v622
  %777 = vmatpush.bf16.msra.mxu0 %v618
  %778 = vmatpush.bf16.msra.mxu0 %v614
  %779 = vmatpush.bf16.msra.mxu0 %v610
  %780 = vmatpush.bf16.msra.mxu0 %v606
  %781 = vmatpush.bf16.msra.mxu0 %v602
  %782 = vmatpush.bf16.msra.mxu0 %v598
  %783 = vmatpush.bf16.msra.mxu0 %v594
  %784 = vmatmul.bf16.gmra.mxu0 %v389
  %v785 = vpop.f32.mrf.mxu0
  %v786 = vadd.f32 %v394, %v785
  %v787 = vpop.f32.mrf.mxu0
  %v788 = vadd.f32 %v394, %v787
  %789 = vdwg.mxu0
  %790 = vmatpush.bf16.msra.mxu0 %v654
  %791 = vmatpush.bf16.msra.mxu0 %v650
  %792 = vmatpush.bf16.msra.mxu0 %v646
  %793 = vmatpush.bf16.msra.mxu0 %v642
  %794 = vmatpush.bf16.msra.mxu0 %v638
  %795 = vmatpush.bf16.msra.mxu0 %v634
  %796 = vmatpush.bf16.msra.mxu0 %v630
  %797 = vmatpush.bf16.msra.mxu0 %v626
  %798 = vmatmul.bf16.gmra.mxu0 %v390
  %v799 = vpop.f32.mrf.mxu0
  %v800 = vadd.f32 %v786, %v799
  %v801 = vpop.f32.mrf.mxu0
  %v802 = vadd.f32 %v788, %v801
  %803 = vdwg.mxu0
  %804 = vmatpush.bf16.msra.mxu0 %v623
  %805 = vmatpush.bf16.msra.mxu0 %v619
  %806 = vmatpush.bf16.msra.mxu0 %v615
  %807 = vmatpush.bf16.msra.mxu0 %v611
  %808 = vmatpush.bf16.msra.mxu0 %v607
  %809 = vmatpush.bf16.msra.mxu0 %v603
  %810 = vmatpush.bf16.msra.mxu0 %v599
  %811 = vmatpush.bf16.msra.mxu0 %v595
  %812 = vmatmul.bf16.gmra.mxu0 %v389
  %v813 = vpop.f32.mrf.mxu0
  %v814 = vadd.f32 %v395, %v813
  %v815 = vpop.f32.mrf.mxu0
  %v816 = vadd.f32 %v395, %v815
  %817 = vdwg.mxu0
  %818 = vmatpush.bf16.msra.mxu0 %v655
  %819 = vmatpush.bf16.msra.mxu0 %v651
  %820 = vmatpush.bf16.msra.mxu0 %v647
  %821 = vmatpush.bf16.msra.mxu0 %v643
  %822 = vmatpush.bf16.msra.mxu0 %v639
  %823 = vmatpush.bf16.msra.mxu0 %v635
  %824 = vmatpush.bf16.msra.mxu0 %v631
  %825 = vmatpush.bf16.msra.mxu0 %v627
  %826 = vmatmul.bf16.gmra.mxu0 %v390
  %v827 = vpop.f32.mrf.mxu0
  %v828 = vadd.f32 %v814, %v827
  %v829 = vpop.f32.mrf.mxu0
  %v830 = vadd.f32 %v816, %v829
  %831 = vdwg.mxu0
  %v832 = vmax.f32 %v744, 0.0
  %v833 = vmax.f32 %v772, 0.0
  %v834 = vmax.f32 %v800, 0.0
  %v835 = vmax.f32 %v828, 0.0
  %v836 = vmax.f32 %v746, 0.0
  %v837 = vmax.f32 %v774, 0.0
  %v838 = vmax.f32 %v802, 0.0
  %v839 = vmax.f32 %v830, 0.0
  %v840 = vld [vmem:[%s5] sm:$0xff]
  %v841 = vld [vmem:[%s5 + $0x8] sm:$0xff]
  %v842 = vld [vmem:[%s5 + $0x10] sm:$0xff]
  %v843 = vld [vmem:[%s5 + $0x18] sm:$0xff]
  %v844 = vld [vmem:[%s5 + $0x20] sm:$0xff]
  %v845 = vld [vmem:[%s5 + $0x28] sm:$0xff]
  %v846 = vld [vmem:[%s5 + $0x30] sm:$0xff]
  %v847 = vld [vmem:[%s5 + $0x38] sm:$0xff]
  %v848 = vld [vmem:[%s5 + $0x40] sm:$0xff]
  %v849 = vld [vmem:[%s5 + $0x48] sm:$0xff]
  %v850 = vld [vmem:[%s5 + $0x50] sm:$0xff]
  %v851 = vld [vmem:[%s5 + $0x58] sm:$0xff]
  %v852 = vld [vmem:[%s5 + $0x60] sm:$0xff]
  %v853 = vld [vmem:[%s5 + $0x68] sm:$0xff]
  %v854 = vld [vmem:[%s5 + $0x70] sm:$0xff]
  %v855 = vld [vmem:[%s5 + $0x78] sm:$0xff]
  %v856 = vld [vmem:[%s5 + $0x80] sm:$0xff]
  %v857 = vld [vmem:[%s5 + $0x88] sm:$0xff]
  %v858 = vld [vmem:[%s5 + $0x90] sm:$0xff]
  %v859 = vld [vmem:[%s5 + $0x98] sm:$0xff]
  %v860 = vld [vmem:[%s5 + $0xa0] sm:$0xff]
  %v861 = vld [vmem:[%s5 + $0xa8] sm:$0xff]
  %v862 = vld [vmem:[%s5 + $0xb0] sm:$0xff]
  %v863 = vld [vmem:[%s5 + $0xb8] sm:$0xff]
  %v864 = vld [vmem:[%s5 + $0xc0] sm:$0xff]
  %v865 = vld [vmem:[%s5 + $0xc8] sm:$0xff]
  %v866 = vld [vmem:[%s5 + $0xd0] sm:$0xff]
  %v867 = vld [vmem:[%s5 + $0xd8] sm:$0xff]
  %v868 = vld [vmem:[%s5 + $0xe0] sm:$0xff]
  %v869 = vld [vmem:[%s5 + $0xe8] sm:$0xff]
  %v870 = vld [vmem:[%s5 + $0xf0] sm:$0xff]
  %v871 = vld [vmem:[%s5 + $0xf8] sm:$0xff]
  %v872 = vld [vmem:[%s5 + $0x100] sm:$0xff]
  %v873 = vld [vmem:[%s5 + $0x108] sm:$0xff]
  %v874 = vld [vmem:[%s5 + $0x110] sm:$0xff]
  %v875 = vld [vmem:[%s5 + $0x118] sm:$0xff]
  %v876 = vld [vmem:[%s5 + $0x120] sm:$0xff]
  %v877 = vld [vmem:[%s5 + $0x128] sm:$0xff]
  %v878 = vld [vmem:[%s5 + $0x130] sm:$0xff]
  %v879 = vld [vmem:[%s5 + $0x138] sm:$0xff]
  %v880 = vld [vmem:[%s5 + $0x140] sm:$0xff]
  %v881 = vld [vmem:[%s5 + $0x148] sm:$0xff]
  %v882 = vld [vmem:[%s5 + $0x150] sm:$0xff]
  %v883 = vld [vmem:[%s5 + $0x158] sm:$0xff]
  %v884 = vld [vmem:[%s5 + $0x160] sm:$0xff]
  %v885 = vld [vmem:[%s5 + $0x168] sm:$0xff]
  %v886 = vld [vmem:[%s5 + $0x170] sm:$0xff]
  %v887 = vld [vmem:[%s5 + $0x178] sm:$0xff]
  %v888 = vld [vmem:[%s5 + $0x180] sm:$0xff]
  %v889 = vld [vmem:[%s5 + $0x188] sm:$0xff]
  %v890 = vld [vmem:[%s5 + $0x190] sm:$0xff]
  %v891 = vld [vmem:[%s5 + $0x198] sm:$0xff]
  %v892 = vld [vmem:[%s5 + $0x1a0] sm:$0xff]
  %v893 = vld [vmem:[%s5 + $0x1a8] sm:$0xff]
  %v894 = vld [vmem:[%s5 + $0x1b0] sm:$0xff]
  %v895 = vld [vmem:[%s5 + $0x1b8] sm:$0xff]
  %v896 = vld [vmem:[%s5 + $0x1c0] sm:$0xff]
  %v897 = vld [vmem:[%s5 + $0x1c8] sm:$0xff]
  %v898 = vld [vmem:[%s5 + $0x1d0] sm:$0xff]
  %v899 = vld [vmem:[%s5 + $0x1d8] sm:$0xff]
  %v900 = vld [vmem:[%s5 + $0x1e0] sm:$0xff]
  %v901 = vld [vmem:[%s5 + $0x1e8] sm:$0xff]
  %v902 = vld [vmem:[%s5 + $0x1f0] sm:$0xff]
  %v903 = vld [vmem:[%s5 + $0x1f8] sm:$0xff]
  %s904 = scalar_lea.vmem %s6, 3
  %v905 = vld [vmem:[%s904] ss:$8 sm:$0x3]
  %v906 = vpack.c.bf16 %v836, %v832
  %v907 = vpack.c.bf16 %v837, %v833
  %v908 = vpack.c.bf16 %v838, %v834
  %v909 = vpack.c.bf16 %v839, %v835
  %v974 = vunpack.c.l.b16 %v840
  %v975 = vunpack.c.h.b16 %v840
  %v976 = vunpack.c.l.b16 %v841
  %v977 = vunpack.c.h.b16 %v841
  %v978 = vunpack.c.l.b16 %v842
  %v979 = vunpack.c.h.b16 %v842
  %v980 = vunpack.c.l.b16 %v843
  %v981 = vunpack.c.h.b16 %v843
  %v982 = vunpack.c.l.b16 %v844
  %v983 = vunpack.c.h.b16 %v844
  %v984 = vunpack.c.l.b16 %v845
  %v985 = vunpack.c.h.b16 %v845
  %v986 = vunpack.c.l.b16 %v846
  %v987 = vunpack.c.h.b16 %v846
  %v988 = vunpack.c.l.b16 %v847
  %v989 = vunpack.c.h.b16 %v847
  %v990 = vunpack.c.l.b16 %v848
  %v991 = vunpack.c.h.b16 %v848
  %v992 = vunpack.c.l.b16 %v849
  %v993 = vunpack.c.h.b16 %v849
  %v994 = vunpack.c.l.b16 %v850
  %v995 = vunpack.c.h.b16 %v850
  %v996 = vunpack.c.l.b16 %v851
  %v997 = vunpack.c.h.b16 %v851
  %v998 = vunpack.c.l.b16 %v852
  %v999 = vunpack.c.h.b16 %v852
  %v1000 = vunpack.c.l.b16 %v853
  %v1001 = vunpack.c.h.b16 %v853
  %v1002 = vunpack.c.l.b16 %v854
  %v1003 = vunpack.c.h.b16 %v854
  %v1004 = vunpack.c.l.b16 %v855
  %v1005 = vunpack.c.h.b16 %v855
  %v1006 = vunpack.c.l.b16 %v856
  %v1007 = vunpack.c.h.b16 %v856
  %v1008 = vunpack.c.l.b16 %v857
  %v1009 = vunpack.c.h.b16 %v857
  %v1010 = vunpack.c.l.b16 %v858
  %v1011 = vunpack.c.h.b16 %v858
  %v1012 = vunpack.c.l.b16 %v859
  %v1013 = vunpack.c.h.b16 %v859
  %v1014 = vunpack.c.l.b16 %v860
  %v1015 = vunpack.c.h.b16 %v860
  %v1016 = vunpack.c.l.b16 %v861
  %v1017 = vunpack.c.h.b16 %v861
  %v1018 = vunpack.c.l.b16 %v862
  %v1019 = vunpack.c.h.b16 %v862
  %v1020 = vunpack.c.l.b16 %v863
  %v1021 = vunpack.c.h.b16 %v863
  %v1022 = vunpack.c.l.b16 %v864
  %v1023 = vunpack.c.h.b16 %v864
  %v1024 = vunpack.c.l.b16 %v865
  %v1025 = vunpack.c.h.b16 %v865
  %v1026 = vunpack.c.l.b16 %v866
  %v1027 = vunpack.c.h.b16 %v866
  %v1028 = vunpack.c.l.b16 %v867
  %v1029 = vunpack.c.h.b16 %v867
  %v1030 = vunpack.c.l.b16 %v868
  %v1031 = vunpack.c.h.b16 %v868
  %v1032 = vunpack.c.l.b16 %v869
  %v1033 = vunpack.c.h.b16 %v869
  %v1034 = vunpack.c.l.b16 %v870
  %v1035 = vunpack.c.h.b16 %v870
  %v1036 = vunpack.c.l.b16 %v871
  %v1037 = vunpack.c.h.b16 %v871
  %v1038 = vunpack.c.l.b16 %v872
  %v1039 = vunpack.c.h.b16 %v872
  %v1040 = vunpack.c.l.b16 %v873
  %v1041 = vunpack.c.h.b16 %v873
  %v1042 = vunpack.c.l.b16 %v874
  %v1043 = vunpack.c.h.b16 %v874
  %v1044 = vunpack.c.l.b16 %v875
  %v1045 = vunpack.c.h.b16 %v875
  %v1046 = vunpack.c.l.b16 %v876
  %v1047 = vunpack.c.h.b16 %v876
  %v1048 = vunpack.c.l.b16 %v877
  %v1049 = vunpack.c.h.b16 %v877
  %v1050 = vunpack.c.l.b16 %v878
  %v1051 = vunpack.c.h.b16 %v878
  %v1052 = vunpack.c.l.b16 %v879
  %v1053 = vunpack.c.h.b16 %v879
  %v1054 = vunpack.c.l.b16 %v880
  %v1055 = vunpack.c.h.b16 %v880
  %v1056 = vunpack.c.l.b16 %v881
  %v1057 = vunpack.c.h.b16 %v881
  %v1058 = vunpack.c.l.b16 %v882
  %v1059 = vunpack.c.h.b16 %v882
  %v1060 = vunpack.c.l.b16 %v883
  %v1061 = vunpack.c.h.b16 %v883
  %v1062 = vunpack.c.l.b16 %v884
  %v1063 = vunpack.c.h.b16 %v884
  %v1064 = vunpack.c.l.b16 %v885
  %v1065 = vunpack.c.h.b16 %v885
  %v1066 = vunpack.c.l.b16 %v886
  %v1067 = vunpack.c.h.b16 %v886
  %v1068 = vunpack.c.l.b16 %v887
  %v1069 = vunpack.c.h.b16 %v887
  %v1070 = vunpack.c.l.b16 %v888
  %v1071 = vunpack.c.h.b16 %v888
  %v1072 = vunpack.c.l.b16 %v889
  %v1073 = vunpack.c.h.b16 %v889
  %v1074 = vunpack.c.l.b16 %v890
  %v1075 = vunpack.c.h.b16 %v890
  %v1076 = vunpack.c.l.b16 %v891
  %v1077 = vunpack.c.h.b16 %v891
  %v1078 = vunpack.c.l.b16 %v892
  %v1079 = vunpack.c.h.b16 %v892
  %v1080 = vunpack.c.l.b16 %v893
  %v1081 = vunpack.c.h.b16 %v893
  %v1082 = vunpack.c.l.b16 %v894
  %v1083 = vunpack.c.h.b16 %v894
  %v1084 = vunpack.c.l.b16 %v895
  %v1085 = vunpack.c.h.b16 %v895
  %v1086 = vunpack.c.l.b16 %v896
  %v1087 = vunpack.c.h.b16 %v896
  %v1088 = vunpack.c.l.b16 %v897
  %v1089 = vunpack.c.h.b16 %v897
  %v1090 = vunpack.c.l.b16 %v898
  %v1091 = vunpack.c.h.b16 %v898
  %v1092 = vunpack.c.l.b16 %v899
  %v1093 = vunpack.c.h.b16 %v899
  %v1094 = vunpack.c.l.b16 %v900
  %v1095 = vunpack.c.h.b16 %v900
  %v1096 = vunpack.c.l.b16 %v901
  %v1097 = vunpack.c.h.b16 %v901
  %v1098 = vunpack.c.l.b16 %v902
  %v1099 = vunpack.c.h.b16 %v902
  %v1100 = vunpack.c.l.b16 %v903
  %v1101 = vunpack.c.h.b16 %v903
  %v1102 = vpack.c.b16 %v976, %v974
  %v1103 = vpack.c.b16 %v977, %v975
  %v1104 = vpack.c.b16 %v980, %v978
  %v1105 = vpack.c.b16 %v981, %v979
  %v1106 = vpack.c.b16 %v984, %v982
  %v1107 = vpack.c.b16 %v985, %v983
  %v1108 = vpack.c.b16 %v988, %v986
  %v1109 = vpack.c.b16 %v989, %v987
  %v1110 = vpack.c.b16 %v992, %v990
  %v1111 = vpack.c.b16 %v993, %v991
  %v1112 = vpack.c.b16 %v996, %v994
  %v1113 = vpack.c.b16 %v997, %v995
  %v1114 = vpack.c.b16 %v1000, %v998
  %v1115 = vpack.c.b16 %v1001, %v999
  %v1116 = vpack.c.b16 %v1004, %v1002
  %v1117 = vpack.c.b16 %v1005, %v1003
  %v1118 = vpack.c.b16 %v1008, %v1006
  %v1119 = vpack.c.b16 %v1009, %v1007
  %v1120 = vpack.c.b16 %v1012, %v1010
  %v1121 = vpack.c.b16 %v1013, %v1011
  %v1122 = vpack.c.b16 %v1016, %v1014
  %v1123 = vpack.c.b16 %v1017, %v1015
  %v1124 = vpack.c.b16 %v1020, %v1018
  %v1125 = vpack.c.b16 %v1021, %v1019
  %v1126 = vpack.c.b16 %v1024, %v1022
  %v1127 = vpack.c.b16 %v1025, %v1023
  %v1128 = vpack.c.b16 %v1028, %v1026
  %v1129 = vpack.c.b16 %v1029, %v1027
  %v1130 = vpack.c.b16 %v1032, %v1030
  %v1131 = vpack.c.b16 %v1033, %v1031
  %v1132 = vpack.c.b16 %v1036, %v1034
  %v1133 = vpack.c.b16 %v1037, %v1035
  %v1134 = vpack.c.b16 %v1040, %v1038
  %v1135 = vpack.c.b16 %v1041, %v1039
  %v1136 = vpack.c.b16 %v1044, %v1042
  %v1137 = vpack.c.b16 %v1045, %v1043
  %v1138 = vpack.c.b16 %v1048, %v1046
  %v1139 = vpack.c.b16 %v1049, %v1047
  %v1140 = vpack.c.b16 %v1052, %v1050
  %v1141 = vpack.c.b16 %v1053, %v1051
  %v1142 = vpack.c.b16 %v1056, %v1054
  %v1143 = vpack.c.b16 %v1057, %v1055
  %v1144 = vpack.c.b16 %v1060, %v1058
  %v1145 = vpack.c.b16 %v1061, %v1059
  %v1146 = vpack.c.b16 %v1064, %v1062
  %v1147 = vpack.c.b16 %v1065, %v1063
  %v1148 = vpack.c.b16 %v1068, %v1066
  %v1149 = vpack.c.b16 %v1069, %v1067
  %v1150 = vpack.c.b16 %v1072, %v1070
  %v1151 = vpack.c.b16 %v1073, %v1071
  %v1152 = vpack.c.b16 %v1076, %v1074
  %v1153 = vpack.c.b16 %v1077, %v1075
  %v1154 = vpack.c.b16 %v1080, %v1078
  %v1155 = vpack.c.b16 %v1081, %v1079
  %v1156 = vpack.c.b16 %v1084, %v1082
  %v1157 = vpack.c.b16 %v1085, %v1083
  %v1158 = vpack.c.b16 %v1088, %v1086
  %v1159 = vpack.c.b16 %v1089, %v1087
  %v1160 = vpack.c.b16 %v1092, %v1090
  %v1161 = vpack.c.b16 %v1093, %v1091
  %v1162 = vpack.c.b16 %v1096, %v1094
  %v1163 = vpack.c.b16 %v1097, %v1095
  %v1164 = vpack.c.b16 %v1100, %v1098
  %v1165 = vpack.c.b16 %v1101, %v1099
  %1230 = vmatpush.bf16.msra.mxu0 %v1116
  %1231 = vmatpush.bf16.msra.mxu0 %v1114
  %1232 = vmatpush.bf16.msra.mxu0 %v1112
  %1233 = vmatpush.bf16.msra.mxu0 %v1110
  %1234 = vmatpush.bf16.msra.mxu0 %v1108
  %1235 = vmatpush.bf16.msra.mxu0 %v1106
  %1236 = vmatpush.bf16.msra.mxu0 %v1104
  %1237 = vmatpush.bf16.msra.mxu0 %v1102
  %1238 = vmatmul.bf16.gmra.mxu0 %v906
  %v1239 = vpop.f32.mrf.mxu0
  %v1240 = vadd.f32 0.0, %v1239
  %v1241 = vpop.f32.mrf.mxu0
  %v1242 = vadd.f32 0.0, %v1241
  %1243 = vdwg.mxu0
  %1244 = vmatpush.bf16.msra.mxu0 %v1132
  %1245 = vmatpush.bf16.msra.mxu0 %v1130
  %1246 = vmatpush.bf16.msra.mxu0 %v1128
  %1247 = vmatpush.bf16.msra.mxu0 %v1126
  %1248 = vmatpush.bf16.msra.mxu0 %v1124
  %1249 = vmatpush.bf16.msra.mxu0 %v1122
  %1250 = vmatpush.bf16.msra.mxu0 %v1120
  %1251 = vmatpush.bf16.msra.mxu0 %v1118
  %1252 = vmatmul.bf16.gmra.mxu0 %v907
  %v1253 = vpop.f32.mrf.mxu0
  %v1254 = vadd.f32 %v1240, %v1253
  %v1255 = vpop.f32.mrf.mxu0
  %v1256 = vadd.f32 %v1242, %v1255
  %1257 = vdwg.mxu0
  %1258 = vmatpush.bf16.msra.mxu0 %v1148
  %1259 = vmatpush.bf16.msra.mxu0 %v1146
  %1260 = vmatpush.bf16.msra.mxu0 %v1144
  %1261 = vmatpush.bf16.msra.mxu0 %v1142
  %1262 = vmatpush.bf16.msra.mxu0 %v1140
  %1263 = vmatpush.bf16.msra.mxu0 %v1138
  %1264 = vmatpush.bf16.msra.mxu0 %v1136
  %1265 = vmatpush.bf16.msra.mxu0 %v1134
  %1266 = vmatmul.bf16.gmra.mxu0 %v908
  %v1267 = vpop.f32.mrf.mxu0
  %v1268 = vadd.f32 %v1254, %v1267
  %v1269 = vpop.f32.mrf.mxu0
  %v1270 = vadd.f32 %v1256, %v1269
  %1271 = vdwg.mxu0
  %1272 = vmatpush.bf16.msra.mxu0 %v1164
  %1273 = vmatpush.bf16.msra.mxu0 %v1162
  %1274 = vmatpush.bf16.msra.mxu0 %v1160
  %1275 = vmatpush.bf16.msra.mxu0 %v1158
  %1276 = vmatpush.bf16.msra.mxu0 %v1156
  %1277 = vmatpush.bf16.msra.mxu0 %v1154
  %1278 = vmatpush.bf16.msra.mxu0 %v1152
  %1279 = vmatpush.bf16.msra.mxu0 %v1150
  %1280 = vmatmul.bf16.gmra.mxu0 %v909
  %v1281 = vpop.f32.mrf.mxu0
  %v1282 = vadd.f32 %v1268, %v1281
  %v1283 = vpop.f32.mrf.mxu0
  %v1284 = vadd.f32 %v1270, %v1283
  %1285 = vdwg.mxu0
  %1286 = vmatpush.bf16.msra.mxu0 %v1117
  %1287 = vmatpush.bf16.msra.mxu0 %v1115
  %1288 = vmatpush.bf16.msra.mxu0 %v1113
  %1289 = vmatpush.bf16.msra.mxu0 %v1111
  %1290 = vmatpush.bf16.msra.mxu0 %v1109
  %1291 = vmatpush.bf16.msra.mxu0 %v1107
  %1292 = vmatpush.bf16.msra.mxu0 %v1105
  %1293 = vmatpush.bf16.msra.mxu0 %v1103
  %1294 = vmatmul.bf16.gmra.mxu0 %v906
  %v1295 = vpop.f32.mrf.mxu0
  %v1296 = vadd.f32 0.0, %v1295
  %v1297 = vpop.f32.mrf.mxu0
  %v1298 = vadd.f32 0.0, %v1297
  %1299 = vdwg.mxu0
  %1300 = vmatpush.bf16.msra.mxu0 %v1133
  %1301 = vmatpush.bf16.msra.mxu0 %v1131
  %1302 = vmatpush.bf16.msra.mxu0 %v1129
  %1303 = vmatpush.bf16.msra.mxu0 %v1127
  %1304 = vmatpush.bf16.msra.mxu0 %v1125
  %1305 = vmatpush.bf16.msra.mxu0 %v1123
  %1306 = vmatpush.bf16.msra.mxu0 %v1121
  %1307 = vmatpush.bf16.msra.mxu0 %v1119
  %1308 = vmatmul.bf16.gmra.mxu0 %v907
  %v1309 = vpop.f32.mrf.mxu0
  %v1310 = vadd.f32 %v1296, %v1309
  %v1311 = vpop.f32.mrf.mxu0
  %v1312 = vadd.f32 %v1298, %v1311
  %1313 = vdwg.mxu0
  %1314 = vmatpush.bf16.msra.mxu0 %v1149
  %1315 = vmatpush.bf16.msra.mxu0 %v1147
  %1316 = vmatpush.bf16.msra.mxu0 %v1145
  %1317 = vmatpush.bf16.msra.mxu0 %v1143
  %1318 = vmatpush.bf16.msra.mxu0 %v1141
  %1319 = vmatpush.bf16.msra.mxu0 %v1139
  %1320 = vmatpush.bf16.msra.mxu0 %v1137
  %1321 = vmatpush.bf16.msra.mxu0 %v1135
  %1322 = vmatmul.bf16.gmra.mxu0 %v908
  %v1323 = vpop.f32.mrf.mxu0
  %v1324 = vadd.f32 %v1310, %v1323
  %v1325 = vpop.f32.mrf.mxu0
  %v1326 = vadd.f32 %v1312, %v1325
  %1327 = vdwg.mxu0
  %1328 = vmatpush.bf16.msra.mxu0 %v1165
  %1329 = vmatpush.bf16.msra.mxu0 %v1163
  %1330 = vmatpush.bf16.msra.mxu0 %v1161
  %1331 = vmatpush.bf16.msra.mxu0 %v1159
  %1332 = vmatpush.bf16.msra.mxu0 %v1157
  %1333 = vmatpush.bf16.msra.mxu0 %v1155
  %1334 = vmatpush.bf16.msra.mxu0 %v1153
  %1335 = vmatpush.bf16.msra.mxu0 %v1151
  %1336 = vmatmul.bf16.gmra.mxu0 %v909
  %v1337 = vpop.f32.mrf.mxu0
  %v1338 = vadd.f32 %v1324, %v1337
  %v1339 = vpop.f32.mrf.mxu0
  %v1340 = vadd.f32 %v1326, %v1339
  %1341 = vdwg.mxu0
  %v1342 = vpack.c.bf16 %v1284, %v1282
  %v1343 = vpack.c.bf16 %v1340, %v1338
  %v1345 = vperm.slane %v905, 0
  %v1346 = vperm.slane %v905, 1
  %1349 = vmatpush.bf16.msra.mxu0 0
  %1350 = vmatpush.bf16.msra.mxu0 0
  %1351 = vmatpush.bf16.msra.mxu0 0
  %1352 = vmatpush.bf16.msra.mxu0 0
  %1353 = vmatpush.bf16.msra.mxu0 0
  %1354 = vmatpush.bf16.msra.mxu0 0
  %1355 = vmatpush.bf16.msra.mxu0 0
  %1356 = vmatpush.bf16.msra.mxu0 %v1342
  %1357 = vmatmul.bf16.gmra.mxu0 %v61
  %v1358 = vpop.f32.mrf.mxu0
  %v1359 = vadd.f32 %v1345, %v1358
  %v1360 = vpop.f32.mrf.mxu0
  %v1361 = vadd.f32 %v1345, %v1360
  %1362 = vdwg.mxu0
  %1363 = vmatpush.bf16.msra.mxu0 0
  %1364 = vmatpush.bf16.msra.mxu0 0
  %1365 = vmatpush.bf16.msra.mxu0 0
  %1366 = vmatpush.bf16.msra.mxu0 0
  %1367 = vmatpush.bf16.msra.mxu0 0
  %1368 = vmatpush.bf16.msra.mxu0 0
  %1369 = vmatpush.bf16.msra.mxu0 0
  %1370 = vmatpush.bf16.msra.mxu0 %v1343
  %1371 = vmatmul.bf16.gmra.mxu0 %v61
  %v1372 = vpop.f32.mrf.mxu0
  %v1373 = vadd.f32 %v1346, %v1372
  %v1374 = vpop.f32.mrf.mxu0
  %v1375 = vadd.f32 %v1346, %v1374
  %1376 = vdwg.mxu0
  %v1377 = vmax.f32 %v1359, 0.0
  %v1378 = vmax.f32 %v1373, 0.0
  %v1379 = vmax.f32 %v1361, 0.0
  %v1380 = vmax.f32 %v1375, 0.0
  %v1381 = vld [vmem:[%s2 + $0x40] sm:$0xf]
  %v1382 = vld [vmem:[%s2 + $0x44] sm:$0xf]
  %v1383 = vld [vmem:[%s2 + $0x48] sm:$0xf]
  %v1384 = vld [vmem:[%s2 + $0x4c] sm:$0xf]
  %v1385 = vld [vmem:[%s2 + $0x50] sm:$0xf]
  %v1386 = vld [vmem:[%s2 + $0x54] sm:$0xf]
  %v1387 = vld [vmem:[%s2 + $0x58] sm:$0xf]
  %v1388 = vld [vmem:[%s2 + $0x5c] sm:$0xf]
  %v1389 = vld [vmem:[%s2 + $0x60] sm:$0xf]
  %v1390 = vld [vmem:[%s2 + $0x64] sm:$0xf]
  %v1391 = vld [vmem:[%s2 + $0x68] sm:$0xf]
  %v1392 = vld [vmem:[%s2 + $0x6c] sm:$0xf]
  %v1393 = vld [vmem:[%s2 + $0x70] sm:$0xf]
  %v1394 = vld [vmem:[%s2 + $0x74] sm:$0xf]
  %v1395 = vld [vmem:[%s2 + $0x78] sm:$0xf]
  %v1396 = vld [vmem:[%s2 + $0x7c] sm:$0xf]
  %v1397 = vld [vmem:[%s2 + $0x80] sm:$0xf]
  %v1398 = vld [vmem:[%s2 + $0x84] sm:$0xf]
  %v1399 = vld [vmem:[%s2 + $0x88] sm:$0xf]
  %v1400 = vld [vmem:[%s2 + $0x8c] sm:$0xf]
  %v1401 = vld [vmem:[%s2 + $0x90] sm:$0xf]
  %v1402 = vld [vmem:[%s2 + $0x94] sm:$0xf]
  %v1403 = vld [vmem:[%s2 + $0x98] sm:$0xf]
  %v1404 = vld [vmem:[%s2 + $0x9c] sm:$0xf]
  %v1405 = vld [vmem:[%s2 + $0xa0] sm:$0xf]
  %v1406 = vld [vmem:[%s2 + $0xa4] sm:$0xf]
  %v1407 = vld [vmem:[%s2 + $0xa8] sm:$0xf]
  %v1408 = vld [vmem:[%s2 + $0xac] sm:$0xf]
  %v1409 = vld [vmem:[%s2 + $0xb0] sm:$0xf]
  %v1410 = vld [vmem:[%s2 + $0xb4] sm:$0xf]
  %v1411 = vld [vmem:[%s2 + $0xb8] sm:$0xf]
  %v1412 = vld [vmem:[%s2 + $0xbc] sm:$0xf]
  %v1413 = vld [vmem:[%s6 + $0x4] ss:$0 sm:$0xff]
  %v1414 = vpack.c.bf16 %v1379, %v1377
  %v1415 = vpack.c.bf16 %v1380, %v1378
  %v1448 = vunpack.c.l.b16 %v1381
  %v1449 = vunpack.c.l.b16 %v1382
  %v1450 = vunpack.c.l.b16 %v1383
  %v1451 = vunpack.c.l.b16 %v1384
  %v1452 = vunpack.c.l.b16 %v1385
  %v1453 = vunpack.c.l.b16 %v1386
  %v1454 = vunpack.c.l.b16 %v1387
  %v1455 = vunpack.c.l.b16 %v1388
  %v1456 = vunpack.c.l.b16 %v1389
  %v1457 = vunpack.c.l.b16 %v1390
  %v1458 = vunpack.c.l.b16 %v1391
  %v1459 = vunpack.c.l.b16 %v1392
  %v1460 = vunpack.c.l.b16 %v1393
  %v1461 = vunpack.c.l.b16 %v1394
  %v1462 = vunpack.c.l.b16 %v1395
  %v1463 = vunpack.c.l.b16 %v1396
  %v1464 = vunpack.c.l.b16 %v1397
  %v1465 = vunpack.c.l.b16 %v1398
  %v1466 = vunpack.c.l.b16 %v1399
  %v1467 = vunpack.c.l.b16 %v1400
  %v1468 = vunpack.c.l.b16 %v1401
  %v1469 = vunpack.c.l.b16 %v1402
  %v1470 = vunpack.c.l.b16 %v1403
  %v1471 = vunpack.c.l.b16 %v1404
  %v1472 = vunpack.c.l.b16 %v1405
  %v1473 = vunpack.c.l.b16 %v1406
  %v1474 = vunpack.c.l.b16 %v1407
  %v1475 = vunpack.c.l.b16 %v1408
  %v1476 = vunpack.c.l.b16 %v1409
  %v1477 = vunpack.c.l.b16 %v1410
  %v1478 = vunpack.c.l.b16 %v1411
  %v1479 = vunpack.c.l.b16 %v1412
  %v1480 = vpack.c.b16 %v1449, %v1448
  %v1481 = vpack.c.b16 %v1451, %v1450
  %v1482 = vpack.c.b16 %v1453, %v1452
  %v1483 = vpack.c.b16 %v1455, %v1454
  %v1484 = vpack.c.b16 %v1457, %v1456
  %v1485 = vpack.c.b16 %v1459, %v1458
  %v1486 = vpack.c.b16 %v1461, %v1460
  %v1487 = vpack.c.b16 %v1463, %v1462
  %v1488 = vpack.c.b16 %v1465, %v1464
  %v1489 = vpack.c.b16 %v1467, %v1466
  %v1490 = vpack.c.b16 %v1469, %v1468
  %v1491 = vpack.c.b16 %v1471, %v1470
  %v1492 = vpack.c.b16 %v1473, %v1472
  %v1493 = vpack.c.b16 %v1475, %v1474
  %v1494 = vpack.c.b16 %v1477, %v1476
  %v1495 = vpack.c.b16 %v1479, %v1478
  %1512 = vmatpush.bf16.msra.mxu0 %v1487
  %1513 = vmatpush.bf16.msra.mxu0 %v1486
  %1514 = vmatpush.bf16.msra.mxu0 %v1485
  %1515 = vmatpush.bf16.msra.mxu0 %v1484
  %1516 = vmatpush.bf16.msra.mxu0 %v1483
  %1517 = vmatpush.bf16.msra.mxu0 %v1482
  %1518 = vmatpush.bf16.msra.mxu0 %v1481
  %1519 = vmatpush.bf16.msra.mxu0 %v1480
  %1520 = vmatmul.bf16.gmra.mxu0 %v1414
  %v1521 = vpop.f32.mrf.mxu0
  %v1522 = vadd.f32 0.0, %v1521
  %v1523 = vpop.f32.mrf.mxu0
  %v1524 = vadd.f32 0.0, %v1523
  %1525 = vdwg.mxu0
  %1526 = vmatpush.bf16.msra.mxu0 %v1495
  %1527 = vmatpush.bf16.msra.mxu0 %v1494
  %1528 = vmatpush.bf16.msra.mxu0 %v1493
  %1529 = vmatpush.bf16.msra.mxu0 %v1492
  %1530 = vmatpush.bf16.msra.mxu0 %v1491
  %1531 = vmatpush.bf16.msra.mxu0 %v1490
  %1532 = vmatpush.bf16.msra.mxu0 %v1489
  %1533 = vmatpush.bf16.msra.mxu0 %v1488
  %1534 = vmatmul.bf16.gmra.mxu0 %v1415
  %v1535 = vpop.f32.mrf.mxu0
  %v1536 = vadd.f32 %v1522, %v1535
  %v1537 = vpop.f32.mrf.mxu0
  %v1538 = vadd.f32 %v1524, %v1537
  %1539 = vdwg.mxu0
  %v1540 = vpack.c.bf16 %v1538, %v1536
  %1541 = vmatpush.bf16.msra.mxu0 0
  %1542 = vmatpush.bf16.msra.mxu0 0
  %1543 = vmatpush.bf16.msra.mxu0 0
  %1544 = vmatpush.bf16.msra.mxu0 0
  %1545 = vmatpush.bf16.msra.mxu0 0
  %1546 = vmatpush.bf16.msra.mxu0 0
  %1547 = vmatpush.bf16.msra.mxu0 0
  %1548 = vmatpush.bf16.msra.mxu0 %v1540
  %1549 = vmatmul.bf16.gmra.mxu0 %v61
  %v1550 = vpop.f32.mrf.mxu0
  %v1551 = vadd.f32 %v1413, %v1550
  %v1552 = vpop.f32.mrf.mxu0
  %v1553 = vadd.f32 %v1413, %v1552
  %1554 = vdwg.mxu0
  %v1555 = vmax.f32 %v1551, 0.0
  %v1556 = vmax.f32 %v1553, 0.0
  %v1557 = vld [vmem:[%s2 + $0xc0] sm:$0xf]
  %v1558 = vld [vmem:[%s2 + $0xc4] sm:$0xf]
  %v1559 = vld [vmem:[%s2 + $0xc8] sm:$0xf]
  %v1560 = vld [vmem:[%s2 + $0xcc] sm:$0xf]
  %v1561 = vld [vmem:[%s2 + $0xd0] sm:$0xf]
  %v1562 = vld [vmem:[%s2 + $0xd4] sm:$0xf]
  %v1563 = vld [vmem:[%s2 + $0xd8] sm:$0xf]
  %v1564 = vld [vmem:[%s2 + $0xdc] sm:$0xf]
  %v1565 = vld [vmem:[%s2 + $0xe0] sm:$0xf]
  %v1566 = vld [vmem:[%s2 + $0xe4] sm:$0xf]
  %v1567 = vld [vmem:[%s2 + $0xe8] sm:$0xf]
  %v1568 = vld [vmem:[%s2 + $0xec] sm:$0xf]
  %v1569 = vld [vmem:[%s2 + $0xf0] sm:$0xf]
  %v1570 = vld [vmem:[%s2 + $0xf4] sm:$0xf]
  %v1571 = vld [vmem:[%s2 + $0xf8] sm:$0xf]
  %v1572 = vld [vmem:[%s2 + $0xfc] sm:$0xf]
  %v1573 = vld [vmem:[%s6 + $0x5] ss:$0 sm:$0xff]
  %v1574 = vpack.c.bf16 %v1556, %v1555
  %v1591 = vunpack.c.l.b16 %v1557
  %v1592 = vunpack.c.l.b16 %v1558
  %v1593 = vunpack.c.l.b16 %v1559
  %v1594 = vunpack.c.l.b16 %v1560
  %v1595 = vunpack.c.l.b16 %v1561
  %v1596 = vunpack.c.l.b16 %v1562
  %v1597 = vunpack.c.l.b16 %v1563
  %v1598 = vunpack.c.l.b16 %v1564
  %v1599 = vunpack.c.l.b16 %v1565
  %v1600 = vunpack.c.l.b16 %v1566
  %v1601 = vunpack.c.l.b16 %v1567
  %v1602 = vunpack.c.l.b16 %v1568
  %v1603 = vunpack.c.l.b16 %v1569
  %v1604 = vunpack.c.l.b16 %v1570
  %v1605 = vunpack.c.l.b16 %v1571
  %v1606 = vunpack.c.l.b16 %v1572
  %v1607 = vpack.c.b16 %v1592, %v1591
  %v1608 = vpack.c.b16 %v1594, %v1593
  %v1609 = vpack.c.b16 %v1596, %v1595
  %v1610 = vpack.c.b16 %v1598, %v1597
  %v1611 = vpack.c.b16 %v1600, %v1599
  %v1612 = vpack.c.b16 %v1602, %v1601
  %v1613 = vpack.c.b16 %v1604, %v1603
  %v1614 = vpack.c.b16 %v1606, %v1605
  %1623 = vmatpush.bf16.msra.mxu0 %v1614
  %1624 = vmatpush.bf16.msra.mxu0 %v1613
  %1625 = vmatpush.bf16.msra.mxu0 %v1612
  %1626 = vmatpush.bf16.msra.mxu0 %v1611
  %1627 = vmatpush.bf16.msra.mxu0 %v1610
  %1628 = vmatpush.bf16.msra.mxu0 %v1609
  %1629 = vmatpush.bf16.msra.mxu0 %v1608
  %1630 = vmatpush.bf16.msra.mxu0 %v1607
  %1631 = vmatmul.bf16.gmra.mxu0 %v1574
  %v1632 = vpop.f32.mrf.mxu0
  %v1633 = vadd.f32 0.0, %v1632
  %v1634 = vpop.f32.mrf.mxu0
  %v1635 = vadd.f32 0.0, %v1634
  %1636 = vdwg.mxu0
  %v1637 = vpack.c.bf16 %v1635, %v1633
  %1638 = vmatpush.bf16.msra.mxu0 0
  %1639 = vmatpush.bf16.msra.mxu0 0
  %1640 = vmatpush.bf16.msra.mxu0 0
  %1641 = vmatpush.bf16.msra.mxu0 0
  %1642 = vmatpush.bf16.msra.mxu0 0
  %1643 = vmatpush.bf16.msra.mxu0 0
  %1644 = vmatpush.bf16.msra.mxu0 0
  %1645 = vmatpush.bf16.msra.mxu0 %v1637
  %1646 = vmatmul.bf16.gmra.mxu0 %v61
  %v1647 = vpop.f32.mrf.mxu0
  %v1648 = vadd.f32 %v1573, %v1647
  %v1649 = vpop.f32.mrf.mxu0
  %v1650 = vadd.f32 %v1573, %v1649
  %1651 = vdwg.mxu0
  %1652 = vst [vmem:[%s7] sm:$0xff] %v1648
  %1653 = vst [vmem:[%s7 + $0x8] sm:$0xff] %v1650
  // Predicated region
  $region30: #{_forward.1} parent=0 // pred_check
    _
  $region31: #{_forward.1} parent=0 // pred_check_branch
    %1655 = sbr.rel (0) target = $region33
  $region32: #{_forward.1} parent=0 // pred_region
    _
  $region33: #{_forward.1} parent=0 // pred_fallthru
    _
  // Predicated region
  $region34: #{_forward.1} parent=0 // pred_check
    _
  $region35: #{_forward.1} parent=0 // pred_check_branch
    %1657 = sbr.rel (0) target = $region37
  $region36: #{_forward.1} parent=0 // pred_region
    _
  $region37: #{_forward.1} parent=0 // pred_fallthru
    _

</llo_original>
